<compile_context>
chip_gen: v6e
topology: v6e:2x2x1
jax: 0.10.0
libtpu: 0.0.40
codegen_flags: <defaults>
</compile_context>

<pallas_src>
import functools

import jax
import jax.numpy as jnp
from jax import lax
from jax.experimental import pallas as pl
from jax.experimental.pallas import tpu as pltpu


def _cross_attn_kernel(x_ref, k_ref, v_ref, *rest, num_heads, head_dim, has_mask):
    """One grid step handles one (batch, query-tile) pair.

    x_ref:    (1, TN, C)  query-token tile                          bf16
    k_ref:    (1, L, C)   precomputed K = c @ Wk^T (per batch)      bf16
    v_ref:    (1, L, C)   precomputed V = c @ Wv^T (per batch)      bf16
    bias_ref: (1, 1, L)   additive mask bias (0 / -1e30), if mask   f32
    wq_ref:   (C, C)      Wq^T * scale                              bf16
    wp_ref:   (C, C)      Wproj^T                                   bf16
    bp_ref:   (1, C)      proj bias                                 f32
    o_ref:    (1, TN, C)  output
    oslab_ref:(TN, C)     per-head output slab (VMEM scratch)       bf16
    """
    if has_mask:
        bias_ref, wq_ref, wp_ref, bp_ref, o_ref, oslab_ref = rest
    else:
        wq_ref, wp_ref, bp_ref, o_ref, oslab_ref = rest
        bias_ref = None

    x = x_ref[0]          # (TN, C) bf16
    k = k_ref[0]          # (L, C)  bf16
    v = v_ref[0]          # (L, C)  bf16
    tn = x.shape[0]
    L = k.shape[0]

    # Q projection on the MXU (scale already folded into Wq in the wrapper).
    q = jnp.dot(x, wq_ref[...],
                preferred_element_type=jnp.float32).astype(jnp.bfloat16)

    if has_mask:
        # Broadcast hoisted out of the head loop (JAX doesn't CSE it).
        bias = jnp.broadcast_to(bias_ref[0], (tn, L))     # (TN, L) f32

    # Per-head attention; each head's output is stored into its lane slice of
    # the (TN, C) scratch slab, then one full-depth projection follows.
    # TODO(synk): head slices are lane-aligned only when head_dim % 128 == 0.
    for h in range(num_heads):
        sl = slice(h * head_dim, (h + 1) * head_dim)
        # s = q_h @ k_h^T expressed as a direct Dh contraction (no XLU transpose).
        s = lax.dot_general(q[:, sl], k[:, sl],
                            dimension_numbers=(((1,), (1,)), ((), ())),
                            preferred_element_type=jnp.float32)      # (TN, L)
        if has_mask:
            s = s + bias
        m = jnp.max(s, axis=-1, keepdims=True)
        e = jnp.exp(s - m)                                            # (TN, L) f32
        l = jnp.sum(e, axis=-1, keepdims=True)                        # (TN, 1)
        # Deferred normalization: matmul with unnormalized exp, then scale the
        # small (TN, Dh) result instead of the (TN, L) probs.
        oh = jnp.dot(e.astype(jnp.bfloat16), v[:, sl],
                     preferred_element_type=jnp.float32)              # (TN, Dh)
        oh = oh * pl.reciprocal(l, approx=True)
        oslab_ref[:, sl] = oh.astype(jnp.bfloat16)

    # Single full-contraction output projection + bias.
    out = jnp.dot(oslab_ref[...], wp_ref[...],
                  preferred_element_type=jnp.float32) + bp_ref[...]
    o_ref[0] = out.astype(o_ref.dtype)


def _tpu_vmem_capacity_bytes():
    try:
        return int(pltpu.get_tpu_info().vmem_capacity_bytes)
    except Exception:
        return 64 * 1024 * 1024   # conservative (v7x per-core VMEM)


def _device_kind():
    try:
        return jax.devices()[0].device_kind.lower()
    except Exception:
        return ""


def cross_attention(x, c, params, mask=None, *, num_heads):
    """Pallas implementation of CrossAttention.forward (inference: no dropout)."""
    B, N, C = x.shape
    _, L, _ = c.shape
    assert C % num_heads == 0
    head_dim = C // num_heads
    scale = head_dim ** (-0.5)
    has_mask = mask is not None
    out_itemsize = jnp.dtype(x.dtype).itemsize

    # bf16 at the pallas boundary; softmax scale folded into Wq (trace-time).
    x_bf = x.astype(jnp.bfloat16)
    c_bf = c.astype(jnp.bfloat16)
    wq_t = (params["wq"].T * scale).astype(jnp.bfloat16)       # (C, C)
    wkv_t = params["wkv"].T.astype(jnp.bfloat16)               # (C, 2C)
    wp_t = params["wproj"].T.astype(jnp.bfloat16)              # (C, C)
    bp = params["bproj"].reshape(1, C).astype(jnp.float32)

    # K/V hoist: one fused bf16 GEMM in plain XLA, shared across all query
    # tiles (K/V depend only on the batch index, not the query tile).
    kv = jnp.einsum("blc,ck->blk", c_bf, wkv_t,
                    preferred_element_type=jnp.float32).astype(jnp.bfloat16)
    k_all = kv[..., :C]                                        # (B, L, C)
    v_all = kv[..., C:]                                        # (B, L, C)

    # --- query-tile selection (generation aware) -----------------------------
    vmem_cap = _tpu_vmem_capacity_bytes()
    kind = _device_kind()

    def est_vmem(tn):
        # Explicit per-block bytes x buffer count (+ rough in-kernel temporaries).
        blocks = (
            tn * C * 2 * 2                          # x tile, bf16, double-buffered
            + 2 * (L * C * 2 * 2)                   # K, V, bf16, double-buffered
            + ((L * 4 * 2) if has_mask else 0)      # mask bias, double-buffered
            + 2 * (C * C * 2)                       # Wq, Wproj, single-buffered
            + C * 4                                 # proj bias, single-buffered
            + tn * C * out_itemsize * 2             # output tile, double-buffered
            + tn * C * 2                            # head-output slab scratch
        )
        temps = (tn * C * 4 + tn * C * 2            # q f32 acc + bf16 copy
                 + 2 * tn * L * 4                   # s / e per head
                 + tn * C * 4)                      # projection f32 acc
        return blocks + temps

    def pick_tn():
        if (("v6" in kind) or ("v7" in kind)) and N % 256 == 0 and \
                est_vmem(256) < vmem_cap // 3:
            return 256                              # fills v6e/v7x 256-wide MXU M dim
        if N % 128 == 0 and est_vmem(128) < vmem_cap // 2:
            return 128
        # Ragged / small N: largest divisor of N <= 128 keeps per-tile VMEM
        # bounded and pipelining over N alive (never TN = N for large N).
        best = 1
        for t in range(1, min(N, 128) + 1):
            if N % t == 0:
                best = t
        return best

    TN = pick_tn()
    grid = (B, N // TN)

    inputs = [x_bf, k_all, v_all]
    if has_mask:
        # Additive bias: 0 where kept, -1e30 where masked.  Finite value: fully
        # masked rows give a uniform softmax instead of the reference's NaN.
        bias = jnp.where(mask.reshape(B, 1, L), 0.0, -1e30).astype(jnp.float32)
        inputs.append(bias)
    inputs += [wq_t, wp_t, bp]

    kernel = functools.partial(_cross_attn_kernel, num_heads=num_heads,
                               head_dim=head_dim, has_mask=has_mask)

    cp_kwargs = dict(dimension_semantics=("parallel", "parallel"))
    est = est_vmem(TN)
    if est > 12 * 1024 * 1024:
        headroom = 12 * 1024 * 1024                 # leave room for compiler scratch
        cp_kwargs["vmem_limit_bytes"] = int(
            min(max(int(1.25 * est), 32 * 1024 * 1024), vmem_cap - headroom))

    def make_call(single_buffer_constants):
        const_kw = ({"pipeline_mode": pl.Buffered(1)}
                    if single_buffer_constants else {})
        in_specs = [
            pl.BlockSpec((1, TN, C), lambda b, n: (b, n, 0)),              # x tile
            pl.BlockSpec((1, L, C), lambda b, n: (b, 0, 0)),               # K
            pl.BlockSpec((1, L, C), lambda b, n: (b, 0, 0)),               # V
        ]
        if has_mask:
            in_specs.append(pl.BlockSpec((1, 1, L), lambda b, n: (b, 0, 0)))
        in_specs += [
            pl.BlockSpec((C, C), lambda b, n: (0, 0), **const_kw),         # Wq^T*scale
            pl.BlockSpec((C, C), lambda b, n: (0, 0), **const_kw),         # Wproj^T
            pl.BlockSpec((1, C), lambda b, n: (0, 0), **const_kw),         # proj bias
        ]
        return pl.pallas_call(
            kernel,
            out_shape=jax.ShapeDtypeStruct((B, N, C), x.dtype),
            grid_spec=pltpu.PrefetchScalarGridSpec(
                num_scalar_prefetch=0,
                grid=grid,
                in_specs=in_specs,
                out_specs=pl.BlockSpec((1, TN, C), lambda b, n: (b, n, 0)),
                scratch_shapes=[pltpu.VMEM((TN, C), jnp.bfloat16)],
            ),
            compiler_params=pltpu.CompilerParams(**cp_kwargs),
        )

    try:
        return make_call(single_buffer_constants=True)(*inputs)
    except Exception:
        # Fallback if this JAX build rejects Buffered(1) on the main pipeline.
        # Identical semantics; constant blocks are just double-buffered.
        return make_call(single_buffer_constants=False)(*inputs)


def _reference(x, c, params, num_heads, mask=None):
    """Pure-JAX f32 reference mirroring the PyTorch forward exactly."""
    B, N, C = x.shape
    _, L, _ = c.shape
    head_dim = C // num_heads
    scale = head_dim ** (-0.5)

    q = x @ params["wq"].T                                    # (B, N, C)
    kv = c @ params["wkv"].T                                  # (B, L, 2C)
    q = q.reshape(B, N, num_heads, head_dim).transpose(0, 2, 1, 3)      # (B,H,N,Dh)
    kv = kv.reshape(B, L, 2, num_heads, head_dim).transpose(2, 0, 3, 1, 4)
    k, v = kv[0], kv[1]                                       # (B,H,L,Dh)

    attn = (q * scale) @ jnp.swapaxes(k, -2, -1)              # (B,H,N,L)
    if mask is not None:
        m = mask.reshape(B, 1, 1, L)
        attn = jnp.where(m, attn, -jnp.inf)
    attn = jax.nn.softmax(attn, axis=-1)
    out = attn @ v                                            # (B,H,N,Dh)
    out = out.transpose(0, 2, 1, 3).reshape(B, N, C)
    out = out @ params["wproj"].T + params["bproj"]
    return out


if __name__ == "__main__":
    B, N, L = 2, 16, 8
    dim, num_heads = 32, 4

    key = jax.random.PRNGKey(0)
    kx, kc, k1, k2, k3, k4, k5, kx2, kc2 = jax.random.split(key, 9)

    x = jax.random.normal(kx, (B, N, dim), jnp.float32)
    c = jax.random.normal(kc, (B, L, dim), jnp.float32)

    params = {
        "wq": 0.05 * jax.random.normal(k1, (dim, dim), jnp.float32),      # q: Linear(dim, dim), no bias
        "wkv": 0.05 * jax.random.normal(k2, (2 * dim, dim), jnp.float32), # kv: Linear(dim, 2*dim), no bias
        "wproj": 0.05 * jax.random.normal(k3, (dim, dim), jnp.float32),   # proj: Linear(dim, dim)
        "bproj": 0.05 * jax.random.normal(k4, (dim,), jnp.float32),       # proj bias
    }

    # bf16 MXU path vs f32 reference -> loose-but-meaningful tolerances.
    TOL = dict(atol=3e-2, rtol=3e-2)

    # Path 1: no mask.
    out = cross_attention(x, c, params, mask=None, num_heads=num_heads)
    out = jax.block_until_ready(out)
    ref = _reference(x, c, params, num_heads, mask=None)
    assert out.shape == (B, N, dim)
    assert jnp.allclose(out, ref, **TOL), "mismatch vs reference (no mask)"

    # Path 2: with mask (each row keeps at least token 0).
    mask = (jax.random.uniform(k5, (B, L)) > 0.3).at[:, 0].set(True)
    out_m = cross_attention(x, c, params, mask=mask, num_heads=num_heads)
    out_m = jax.block_until_ready(out_m)
    ref_m = _reference(x, c, params, num_heads, mask=mask)
    assert jnp.allclose(out_m, ref_m, **TOL), "mismatch vs reference (masked)"

    # Path 3: multi-tile query axis (exercises TN tiling and K/V reuse across
    # query tiles of the same batch).
    B3, N3 = 1, 512
    x3 = jax.random.normal(kx2, (B3, N3, dim), jnp.float32)
    c3 = jax.random.normal(kc2, (B3, L, dim), jnp.float32)
    out3 = cross_attention(x3, c3, params, mask=None, num_heads=num_heads)
    out3 = jax.block_until_ready(out3)
    ref3 = _reference(x3, c3, params, num_heads, mask=None)
    assert jnp.allclose(out3, ref3, **TOL), "mismatch vs reference (tiled N)"

    print("KERNEL_OK")
</pallas_src>

<mosaic_0001>
module attributes {stable_mosaic.version = 11 : i64} {
  func.func @_cross_attn_kernel(%arg0: i32, %arg1: i32, %arg2: memref<1x16x32xbf16, #tpu.memory_space<vmem>>, %arg3: memref<1x8x32xbf16, #tpu.memory_space<vmem>>, %arg4: memref<1x8x32xbf16, #tpu.memory_space<vmem>>, %arg5: memref<32x32xbf16, #tpu.memory_space<vmem>>, %arg6: memref<32x32xbf16, #tpu.memory_space<vmem>>, %arg7: memref<1x32xf32, #tpu.memory_space<vmem>>, %arg8: memref<1x16x32xf32, #tpu.memory_space<vmem>>, %arg9: memref<16x32xbf16, #tpu.memory_space<vmem>>) attributes {dimension_semantics = [#tpu.dimension_semantics<parallel>, #tpu.dimension_semantics<parallel>], iteration_bounds = array<i64: 2, 1>, scalar_prefetch = 0 : i64, scratch_operands = 1 : i64, tpu.core_type = #tpu.core_type<tc>, window_params = [{transform_indices = @transform_0, window_bounds = array<i64: 1, 16, 32>}, {transform_indices = @transform_1, window_bounds = array<i64: 1, 8, 32>}, {transform_indices = @transform_2, window_bounds = array<i64: 1, 8, 32>}, {pipeline_mode = #tpu.pipeline_mode<synchronous>, transform_indices = @transform_3, window_bounds = array<i64: 32, 32>}, {pipeline_mode = #tpu.pipeline_mode<synchronous>, transform_indices = @transform_4, window_bounds = array<i64: 32, 32>}, {pipeline_mode = #tpu.pipeline_mode<synchronous>, transform_indices = @transform_5, window_bounds = array<i64: 1, 32>}, {transform_indices = @transform_6, window_bounds = array<i64: 1, 16, 32>}]} {
    %c0 = arith.constant 0 : index
    %c0_0 = arith.constant 0 : index
    %c0_1 = arith.constant 0 : index
    %0 = vector.load %arg2[%c0, %c0_0, %c0_1] : memref<1x16x32xbf16, #tpu.memory_space<vmem>>, vector<1x16x32xbf16>
    %1 = vector.shape_cast %0 : vector<1x16x32xbf16> to vector<16x32xbf16>
    %c0_2 = arith.constant 0 : index
    %c0_3 = arith.constant 0 : index
    %c0_4 = arith.constant 0 : index
    %2 = vector.load %arg3[%c0_2, %c0_3, %c0_4] : memref<1x8x32xbf16, #tpu.memory_space<vmem>>, vector<1x8x32xbf16>
    %3 = vector.shape_cast %2 : vector<1x8x32xbf16> to vector<8x32xbf16>
    %c0_5 = arith.constant 0 : index
    %c0_6 = arith.constant 0 : index
    %c0_7 = arith.constant 0 : index
    %4 = vector.load %arg4[%c0_5, %c0_6, %c0_7] : memref<1x8x32xbf16, #tpu.memory_space<vmem>>, vector<1x8x32xbf16>
    %5 = vector.shape_cast %4 : vector<1x8x32xbf16> to vector<8x32xbf16>
    %c0_8 = arith.constant 0 : index
    %c0_9 = arith.constant 0 : index
    %6 = vector.load %arg5[%c0_8, %c0_9] : memref<32x32xbf16, #tpu.memory_space<vmem>>, vector<32x32xbf16>
    %cst = arith.constant dense<0.000000e+00> : vector<16x32xf32>
    %7 = tpu.matmul %1, %6, %cst {dimension_numbers = #tpu.dot_dimension_numbers<[1], [0], [0], [1], [0, 0, 1, 1], [], []>} : vector<16x32xbf16>, vector<32x32xbf16>, vector<16x32xf32> -> vector<16x32xf32>
    %8 = arith.truncf %7 : vector<16x32xf32> to vector<16x32xbf16>
    %9 = vector.extract_strided_slice %8 {offsets = [0, 0], sizes = [16, 8], strides = [1, 1]} : vector<16x32xbf16> to vector<16x8xbf16>
    %10 = vector.extract_strided_slice %3 {offsets = [0, 0], sizes = [8, 8], strides = [1, 1]} : vector<8x32xbf16> to vector<8x8xbf16>
    %cst_10 = arith.constant dense<0.000000e+00> : vector<16x8xf32>
    %11 = tpu.matmul %9, %10, %cst_10 {dimension_numbers = #tpu.dot_dimension_numbers<[1], [1], [0], [0], [0, 0, 1, 0], [], []>} : vector<16x8xbf16>, vector<8x8xbf16>, vector<16x8xf32> -> vector<16x8xf32>
    %cst_11 = arith.constant dense<0xFF800000> : vector<16xf32>
    %12 = vector.multi_reduction <maximumf>, %11, %cst_11 [1] : vector<16x8xf32> to vector<16xf32>
    %13 = vector.shape_cast %12 : vector<16xf32> to vector<16x1xf32>
    %14 = vector.broadcast %13 : vector<16x1xf32> to vector<16x8xf32>
    %15 = arith.subf %11, %14 : vector<16x8xf32>
    %16 = math.exp %15 : vector<16x8xf32>
    %cst_12 = arith.constant dense<0.000000e+00> : vector<16xf32>
    %17 = vector.multi_reduction <add>, %16, %cst_12 [1] : vector<16x8xf32> to vector<16xf32>
    %18 = vector.shape_cast %17 : vector<16xf32> to vector<16x1xf32>
    %19 = arith.truncf %16 : vector<16x8xf32> to vector<16x8xbf16>
    %20 = vector.extract_strided_slice %5 {offsets = [0, 0], sizes = [8, 8], strides = [1, 1]} : vector<8x32xbf16> to vector<8x8xbf16>
    %cst_13 = arith.constant dense<0.000000e+00> : vector<16x8xf32>
    %21 = tpu.matmul %19, %20, %cst_13 {dimension_numbers = #tpu.dot_dimension_numbers<[1], [0], [0], [1], [0, 0, 1, 1], [], []>} : vector<16x8xbf16>, vector<8x8xbf16>, vector<16x8xf32> -> vector<16x8xf32>
    %22 = tpu.reciprocal %18 {approx = true} : vector<16x1xf32> -> vector<16x1xf32>
    %23 = vector.broadcast %22 : vector<16x1xf32> to vector<16x8xf32>
    %24 = arith.mulf %21, %23 : vector<16x8xf32>
    %25 = arith.truncf %24 : vector<16x8xf32> to vector<16x8xbf16>
    %c0_14 = arith.constant 0 : index
    %c0_15 = arith.constant 0 : index
    %26 = vector.load %arg9[%c0_14, %c0_15] : memref<16x32xbf16, #tpu.memory_space<vmem>>, vector<16x8xbf16>
    tpu.vector_store %arg9[%c0_14, %c0_15], %25 {strides = array<i32>} : memref<16x32xbf16, #tpu.memory_space<vmem>>, vector<16x8xbf16>,
    %27 = vector.extract_strided_slice %8 {offsets = [0, 8], sizes = [16, 8], strides = [1, 1]} : vector<16x32xbf16> to vector<16x8xbf16>
    %28 = vector.extract_strided_slice %3 {offsets = [0, 8], sizes = [8, 8], strides = [1, 1]} : vector<8x32xbf16> to vector<8x8xbf16>
    %cst_16 = arith.constant dense<0.000000e+00> : vector<16x8xf32>
    %29 = tpu.matmul %27, %28, %cst_16 {dimension_numbers = #tpu.dot_dimension_numbers<[1], [1], [0], [0], [0, 0, 1, 0], [], []>} : vector<16x8xbf16>, vector<8x8xbf16>, vector<16x8xf32> -> vector<16x8xf32>
    %cst_17 = arith.constant dense<0xFF800000> : vector<16xf32>
    %30 = vector.multi_reduction <maximumf>, %29, %cst_17 [1] : vector<16x8xf32> to vector<16xf32>
    %31 = vector.shape_cast %30 : vector<16xf32> to vector<16x1xf32>
    %32 = vector.broadcast %31 : vector<16x1xf32> to vector<16x8xf32>
    %33 = arith.subf %29, %32 : vector<16x8xf32>
    %34 = math.exp %33 : vector<16x8xf32>
    %cst_18 = arith.constant dense<0.000000e+00> : vector<16xf32>
    %35 = vector.multi_reduction <add>, %34, %cst_18 [1] : vector<16x8xf32> to vector<16xf32>
    %36 = vector.shape_cast %35 : vector<16xf32> to vector<16x1xf32>
    %37 = arith.truncf %34 : vector<16x8xf32> to vector<16x8xbf16>
    %38 = vector.extract_strided_slice %5 {offsets = [0, 8], sizes = [8, 8], strides = [1, 1]} : vector<8x32xbf16> to vector<8x8xbf16>
    %cst_19 = arith.constant dense<0.000000e+00> : vector<16x8xf32>
    %39 = tpu.matmul %37, %38, %cst_19 {dimension_numbers = #tpu.dot_dimension_numbers<[1], [0], [0], [1], [0, 0, 1, 1], [], []>} : vector<16x8xbf16>, vector<8x8xbf16>, vector<16x8xf32> -> vector<16x8xf32>
    %40 = tpu.reciprocal %36 {approx = true} : vector<16x1xf32> -> vector<16x1xf32>
    %41 = vector.broadcast %40 : vector<16x1xf32> to vector<16x8xf32>
    %42 = arith.mulf %39, %41 : vector<16x8xf32>
    %43 = arith.truncf %42 : vector<16x8xf32> to vector<16x8xbf16>
    %c0_20 = arith.constant 0 : index
    %c8 = arith.constant 8 : index
    %44 = vector.load %arg9[%c0_20, %c8] : memref<16x32xbf16, #tpu.memory_space<vmem>>, vector<16x8xbf16>
    tpu.vector_store %arg9[%c0_20, %c8], %43 {strides = array<i32>} : memref<16x32xbf16, #tpu.memory_space<vmem>>, vector<16x8xbf16>,
    %45 = vector.extract_strided_slice %8 {offsets = [0, 16], sizes = [16, 8], strides = [1, 1]} : vector<16x32xbf16> to vector<16x8xbf16>
    %46 = vector.extract_strided_slice %3 {offsets = [0, 16], sizes = [8, 8], strides = [1, 1]} : vector<8x32xbf16> to vector<8x8xbf16>
    %cst_21 = arith.constant dense<0.000000e+00> : vector<16x8xf32>
    %47 = tpu.matmul %45, %46, %cst_21 {dimension_numbers = #tpu.dot_dimension_numbers<[1], [1], [0], [0], [0, 0, 1, 0], [], []>} : vector<16x8xbf16>, vector<8x8xbf16>, vector<16x8xf32> -> vector<16x8xf32>
    %cst_22 = arith.constant dense<0xFF800000> : vector<16xf32>
    %48 = vector.multi_reduction <maximumf>, %47, %cst_22 [1] : vector<16x8xf32> to vector<16xf32>
    %49 = vector.shape_cast %48 : vector<16xf32> to vector<16x1xf32>
    %50 = vector.broadcast %49 : vector<16x1xf32> to vector<16x8xf32>
    %51 = arith.subf %47, %50 : vector<16x8xf32>
    %52 = math.exp %51 : vector<16x8xf32>
    %cst_23 = arith.constant dense<0.000000e+00> : vector<16xf32>
    %53 = vector.multi_reduction <add>, %52, %cst_23 [1] : vector<16x8xf32> to vector<16xf32>
    %54 = vector.shape_cast %53 : vector<16xf32> to vector<16x1xf32>
    %55 = arith.truncf %52 : vector<16x8xf32> to vector<16x8xbf16>
    %56 = vector.extract_strided_slice %5 {offsets = [0, 16], sizes = [8, 8], strides = [1, 1]} : vector<8x32xbf16> to vector<8x8xbf16>
    %cst_24 = arith.constant dense<0.000000e+00> : vector<16x8xf32>
    %57 = tpu.matmul %55, %56, %cst_24 {dimension_numbers = #tpu.dot_dimension_numbers<[1], [0], [0], [1], [0, 0, 1, 1], [], []>} : vector<16x8xbf16>, vector<8x8xbf16>, vector<16x8xf32> -> vector<16x8xf32>
    %58 = tpu.reciprocal %54 {approx = true} : vector<16x1xf32> -> vector<16x1xf32>
    %59 = vector.broadcast %58 : vector<16x1xf32> to vector<16x8xf32>
    %60 = arith.mulf %57, %59 : vector<16x8xf32>
    %61 = arith.truncf %60 : vector<16x8xf32> to vector<16x8xbf16>
    %c0_25 = arith.constant 0 : index
    %c16 = arith.constant 16 : index
    %62 = vector.load %arg9[%c0_25, %c16] : memref<16x32xbf16, #tpu.memory_space<vmem>>, vector<16x8xbf16>
    tpu.vector_store %arg9[%c0_25, %c16], %61 {strides = array<i32>} : memref<16x32xbf16, #tpu.memory_space<vmem>>, vector<16x8xbf16>,
    %63 = vector.extract_strided_slice %8 {offsets = [0, 24], sizes = [16, 8], strides = [1, 1]} : vector<16x32xbf16> to vector<16x8xbf16>
    %64 = vector.extract_strided_slice %3 {offsets = [0, 24], sizes = [8, 8], strides = [1, 1]} : vector<8x32xbf16> to vector<8x8xbf16>
    %cst_26 = arith.constant dense<0.000000e+00> : vector<16x8xf32>
    %65 = tpu.matmul %63, %64, %cst_26 {dimension_numbers = #tpu.dot_dimension_numbers<[1], [1], [0], [0], [0, 0, 1, 0], [], []>} : vector<16x8xbf16>, vector<8x8xbf16>, vector<16x8xf32> -> vector<16x8xf32>
    %cst_27 = arith.constant dense<0xFF800000> : vector<16xf32>
    %66 = vector.multi_reduction <maximumf>, %65, %cst_27 [1] : vector<16x8xf32> to vector<16xf32>
    %67 = vector.shape_cast %66 : vector<16xf32> to vector<16x1xf32>
    %68 = vector.broadcast %67 : vector<16x1xf32> to vector<16x8xf32>
    %69 = arith.subf %65, %68 : vector<16x8xf32>
    %70 = math.exp %69 : vector<16x8xf32>
    %cst_28 = arith.constant dense<0.000000e+00> : vector<16xf32>
    %71 = vector.multi_reduction <add>, %70, %cst_28 [1] : vector<16x8xf32> to vector<16xf32>
    %72 = vector.shape_cast %71 : vector<16xf32> to vector<16x1xf32>
    %73 = arith.truncf %70 : vector<16x8xf32> to vector<16x8xbf16>
    %74 = vector.extract_strided_slice %5 {offsets = [0, 24], sizes = [8, 8], strides = [1, 1]} : vector<8x32xbf16> to vector<8x8xbf16>
    %cst_29 = arith.constant dense<0.000000e+00> : vector<16x8xf32>
    %75 = tpu.matmul %73, %74, %cst_29 {dimension_numbers = #tpu.dot_dimension_numbers<[1], [0], [0], [1], [0, 0, 1, 1], [], []>} : vector<16x8xbf16>, vector<8x8xbf16>, vector<16x8xf32> -> vector<16x8xf32>
    %76 = tpu.reciprocal %72 {approx = true} : vector<16x1xf32> -> vector<16x1xf32>
    %77 = vector.broadcast %76 : vector<16x1xf32> to vector<16x8xf32>
    %78 = arith.mulf %75, %77 : vector<16x8xf32>
    %79 = arith.truncf %78 : vector<16x8xf32> to vector<16x8xbf16>
    %c0_30 = arith.constant 0 : index
    %c24 = arith.constant 24 : index
    %80 = vector.load %arg9[%c0_30, %c24] : memref<16x32xbf16, #tpu.memory_space<vmem>>, vector<16x8xbf16>
    tpu.vector_store %arg9[%c0_30, %c24], %79 {strides = array<i32>} : memref<16x32xbf16, #tpu.memory_space<vmem>>, vector<16x8xbf16>,
    %c0_31 = arith.constant 0 : index
    %c0_32 = arith.constant 0 : index
    %81 = vector.load %arg9[%c0_31, %c0_32] : memref<16x32xbf16, #tpu.memory_space<vmem>>, vector<16x32xbf16>
    %c0_33 = arith.constant 0 : index
    %c0_34 = arith.constant 0 : index
    %82 = vector.load %arg6[%c0_33, %c0_34] : memref<32x32xbf16, #tpu.memory_space<vmem>>, vector<32x32xbf16>
    %cst_35 = arith.constant dense<0.000000e+00> : vector<16x32xf32>
    %83 = tpu.matmul %81, %82, %cst_35 {dimension_numbers = #tpu.dot_dimension_numbers<[1], [0], [0], [1], [0, 0, 1, 1], [], []>} : vector<16x32xbf16>, vector<32x32xbf16>, vector<16x32xf32> -> vector<16x32xf32>
    %c0_36 = arith.constant 0 : index
    %c0_37 = arith.constant 0 : index
    %84 = vector.load %arg7[%c0_36, %c0_37] : memref<1x32xf32, #tpu.memory_space<vmem>>, vector<1x32xf32>
    %85 = vector.broadcast %84 : vector<1x32xf32> to vector<16x32xf32>
    %86 = arith.addf %83, %85 : vector<16x32xf32>
    %c0_38 = arith.constant 0 : index
    %c0_39 = arith.constant 0 : index
    %c0_40 = arith.constant 0 : index
    %87 = vector.load %arg8[%c0_38, %c0_39, %c0_40] : memref<1x16x32xf32, #tpu.memory_space<vmem>>, vector<1x16x32xf32>
    %88 = vector.shape_cast %87 : vector<1x16x32xf32> to vector<16x32xf32>
    %89 = vector.shape_cast %86 : vector<16x32xf32> to vector<1x16x32xf32>
    tpu.vector_store %arg8[%c0_38, %c0_39, %c0_40], %89 {strides = array<i32>} : memref<1x16x32xf32, #tpu.memory_space<vmem>>, vector<1x16x32xf32>,
    return
  }
  func.func @transform_0(%arg0: i32, %arg1: i32) -> (i32, i32, i32) {
    %c0_i32 = arith.constant 0 : i32
    %c0_i32_0 = arith.constant 0 : i32
    return %arg0, %arg1, %c0_i32 : i32, i32, i32
  }
  func.func @transform_1(%arg0: i32, %arg1: i32) -> (i32, i32, i32) {
    %c0_i32 = arith.constant 0 : i32
    %c0_i32_0 = arith.constant 0 : i32
    %c0_i32_1 = arith.constant 0 : i32
    return %arg0, %c0_i32, %c0_i32_0 : i32, i32, i32
  }
  func.func @transform_2(%arg0: i32, %arg1: i32) -> (i32, i32, i32) {
    %c0_i32 = arith.constant 0 : i32
    %c0_i32_0 = arith.constant 0 : i32
    %c0_i32_1 = arith.constant 0 : i32
    return %arg0, %c0_i32, %c0_i32_0 : i32, i32, i32
  }
  func.func @transform_3(%arg0: i32, %arg1: i32) -> (i32, i32) {
    %c0_i32 = arith.constant 0 : i32
    %c0_i32_0 = arith.constant 0 : i32
    %c0_i32_1 = arith.constant 0 : i32
    return %c0_i32, %c0_i32_0 : i32, i32
  }
  func.func @transform_4(%arg0: i32, %arg1: i32) -> (i32, i32) {
    %c0_i32 = arith.constant 0 : i32
    %c0_i32_0 = arith.constant 0 : i32
    %c0_i32_1 = arith.constant 0 : i32
    return %c0_i32, %c0_i32_0 : i32, i32
  }
  func.func @transform_5(%arg0: i32, %arg1: i32) -> (i32, i32) {
    %c0_i32 = arith.constant 0 : i32
    %c0_i32_0 = arith.constant 0 : i32
    %c0_i32_1 = arith.constant 0 : i32
    return %c0_i32, %c0_i32_0 : i32, i32
  }
  func.func @transform_6(%arg0: i32, %arg1: i32) -> (i32, i32, i32) {
    %c0_i32 = arith.constant 0 : i32
    %c0_i32_0 = arith.constant 0 : i32
    return %arg0, %arg1, %c0_i32 : i32, i32, i32
  }
}

module attributes {stable_mosaic.version = 11 : i64} {
  func.func @_cross_attn_kernel(%arg0: i32, %arg1: i32, %arg2: memref<1x16x32xbf16, #tpu.memory_space<vmem>>, %arg3: memref<1x8x32xbf16, #tpu.memory_space<vmem>>, %arg4: memref<1x8x32xbf16, #tpu.memory_space<vmem>>, %arg5: memref<32x32xbf16, #tpu.memory_space<vmem>>, %arg6: memref<32x32xbf16, #tpu.memory_space<vmem>>, %arg7: memref<1x32xf32, #tpu.memory_space<vmem>>, %arg8: memref<1x16x32xf32, #tpu.memory_space<vmem>>, %arg9: memref<16x32xbf16, #tpu.memory_space<vmem>>) attributes {dimension_semantics = [#tpu.dimension_semantics<parallel>, #tpu.dimension_semantics<parallel>], iteration_bounds = array<i64: 2, 1>, scalar_prefetch = 0 : i64, scratch_operands = 1 : i64, tpu.core_type = #tpu.core_type<tc>, window_params = [{transform_indices = @transform_0, window_bounds = array<i64: 1, 16, 32>}, {transform_indices = @transform_1, window_bounds = array<i64: 1, 8, 32>}, {transform_indices = @transform_2, window_bounds = array<i64: 1, 8, 32>}, {pipeline_mode = #tpu.pipeline_mode<synchronous>, transform_indices = @transform_3, window_bounds = array<i64: 32, 32>}, {pipeline_mode = #tpu.pipeline_mode<synchronous>, transform_indices = @transform_4, window_bounds = array<i64: 32, 32>}, {pipeline_mode = #tpu.pipeline_mode<synchronous>, transform_indices = @transform_5, window_bounds = array<i64: 1, 32>}, {transform_indices = @transform_6, window_bounds = array<i64: 1, 16, 32>}]} {
    %c0 = arith.constant 0 : index
    %c0_0 = arith.constant 0 : index
    %c0_1 = arith.constant 0 : index
    %0 = vector.load %arg2[%c0, %c0_0, %c0_1] : memref<1x16x32xbf16, #tpu.memory_space<vmem>>, vector<1x16x32xbf16>
    %1 = vector.shape_cast %0 : vector<1x16x32xbf16> to vector<16x32xbf16>
    %c0_2 = arith.constant 0 : index
    %c0_3 = arith.constant 0 : index
    %c0_4 = arith.constant 0 : index
    %2 = vector.load %arg3[%c0_2, %c0_3, %c0_4] : memref<1x8x32xbf16, #tpu.memory_space<vmem>>, vector<1x8x32xbf16>
    %3 = vector.shape_cast %2 : vector<1x8x32xbf16> to vector<8x32xbf16>
    %c0_5 = arith.constant 0 : index
    %c0_6 = arith.constant 0 : index
    %c0_7 = arith.constant 0 : index
    %4 = vector.load %arg4[%c0_5, %c0_6, %c0_7] : memref<1x8x32xbf16, #tpu.memory_space<vmem>>, vector<1x8x32xbf16>
    %5 = vector.shape_cast %4 : vector<1x8x32xbf16> to vector<8x32xbf16>
    %c0_8 = arith.constant 0 : index
    %c0_9 = arith.constant 0 : index
    %6 = vector.load %arg5[%c0_8, %c0_9] : memref<32x32xbf16, #tpu.memory_space<vmem>>, vector<32x32xbf16>
    %cst = arith.constant dense<0.000000e+00> : vector<16x32xf32>
    %7 = tpu.matmul %1, %6, %cst {dimension_numbers = #tpu.dot_dimension_numbers<[1], [0], [0], [1], [0, 0, 1, 1], [], []>} : vector<16x32xbf16>, vector<32x32xbf16>, vector<16x32xf32> -> vector<16x32xf32>
    %8 = arith.truncf %7 : vector<16x32xf32> to vector<16x32xbf16>
    %9 = vector.extract_strided_slice %8 {offsets = [0, 0], sizes = [16, 8], strides = [1, 1]} : vector<16x32xbf16> to vector<16x8xbf16>
    %10 = vector.extract_strided_slice %3 {offsets = [0, 0], sizes = [8, 8], strides = [1, 1]} : vector<8x32xbf16> to vector<8x8xbf16>
    %cst_10 = arith.constant dense<0.000000e+00> : vector<16x8xf32>
    %11 = tpu.matmul %9, %10, %cst_10 {dimension_numbers = #tpu.dot_dimension_numbers<[1], [1], [0], [0], [0, 0, 1, 0], [], []>} : vector<16x8xbf16>, vector<8x8xbf16>, vector<16x8xf32> -> vector<16x8xf32>
    %cst_11 = arith.constant dense<0xFF800000> : vector<16xf32>
    %12 = vector.multi_reduction <maximumf>, %11, %cst_11 [1] : vector<16x8xf32> to vector<16xf32>
    %13 = vector.shape_cast %12 : vector<16xf32> to vector<16x1xf32>
    %14 = vector.broadcast %13 : vector<16x1xf32> to vector<16x8xf32>
    %15 = arith.subf %11, %14 : vector<16x8xf32>
    %16 = math.exp %15 : vector<16x8xf32>
    %cst_12 = arith.constant dense<0.000000e+00> : vector<16xf32>
    %17 = vector.multi_reduction <add>, %16, %cst_12 [1] : vector<16x8xf32> to vector<16xf32>
    %18 = vector.shape_cast %17 : vector<16xf32> to vector<16x1xf32>
    %19 = arith.truncf %16 : vector<16x8xf32> to vector<16x8xbf16>
    %20 = vector.extract_strided_slice %5 {offsets = [0, 0], sizes = [8, 8], strides = [1, 1]} : vector<8x32xbf16> to vector<8x8xbf16>
    %cst_13 = arith.constant dense<0.000000e+00> : vector<16x8xf32>
    %21 = tpu.matmul %19, %20, %cst_13 {dimension_numbers = #tpu.dot_dimension_numbers<[1], [0], [0], [1], [0, 0, 1, 1], [], []>} : vector<16x8xbf16>, vector<8x8xbf16>, vector<16x8xf32> -> vector<16x8xf32>
    %22 = tpu.reciprocal %18 {approx = true} : vector<16x1xf32> -> vector<16x1xf32>
    %23 = vector.broadcast %22 : vector<16x1xf32> to vector<16x8xf32>
    %24 = arith.mulf %21, %23 : vector<16x8xf32>
    %25 = arith.truncf %24 : vector<16x8xf32> to vector<16x8xbf16>
    %c0_14 = arith.constant 0 : index
    %c0_15 = arith.constant 0 : index
    %26 = vector.load %arg9[%c0_14, %c0_15] : memref<16x32xbf16, #tpu.memory_space<vmem>>, vector<16x8xbf16>
    tpu.vector_store %arg9[%c0_14, %c0_15], %25 {strides = array<i32>} : memref<16x32xbf16, #tpu.memory_space<vmem>>, vector<16x8xbf16>,
    %27 = vector.extract_strided_slice %8 {offsets = [0, 8], sizes = [16, 8], strides = [1, 1]} : vector<16x32xbf16> to vector<16x8xbf16>
    %28 = vector.extract_strided_slice %3 {offsets = [0, 8], sizes = [8, 8], strides = [1, 1]} : vector<8x32xbf16> to vector<8x8xbf16>
    %cst_16 = arith.constant dense<0.000000e+00> : vector<16x8xf32>
    %29 = tpu.matmul %27, %28, %cst_16 {dimension_numbers = #tpu.dot_dimension_numbers<[1], [1], [0], [0], [0, 0, 1, 0], [], []>} : vector<16x8xbf16>, vector<8x8xbf16>, vector<16x8xf32> -> vector<16x8xf32>
    %cst_17 = arith.constant dense<0xFF800000> : vector<16xf32>
    %30 = vector.multi_reduction <maximumf>, %29, %cst_17 [1] : vector<16x8xf32> to vector<16xf32>
    %31 = vector.shape_cast %30 : vector<16xf32> to vector<16x1xf32>
    %32 = vector.broadcast %31 : vector<16x1xf32> to vector<16x8xf32>
    %33 = arith.subf %29, %32 : vector<16x8xf32>
    %34 = math.exp %33 : vector<16x8xf32>
    %cst_18 = arith.constant dense<0.000000e+00> : vector<16xf32>
    %35 = vector.multi_reduction <add>, %34, %cst_18 [1] : vector<16x8xf32> to vector<16xf32>
    %36 = vector.shape_cast %35 : vector<16xf32> to vector<16x1xf32>
    %37 = arith.truncf %34 : vector<16x8xf32> to vector<16x8xbf16>
    %38 = vector.extract_strided_slice %5 {offsets = [0, 8], sizes = [8, 8], strides = [1, 1]} : vector<8x32xbf16> to vector<8x8xbf16>
    %cst_19 = arith.constant dense<0.000000e+00> : vector<16x8xf32>
    %39 = tpu.matmul %37, %38, %cst_19 {dimension_numbers = #tpu.dot_dimension_numbers<[1], [0], [0], [1], [0, 0, 1, 1], [], []>} : vector<16x8xbf16>, vector<8x8xbf16>, vector<16x8xf32> -> vector<16x8xf32>
    %40 = tpu.reciprocal %36 {approx = true} : vector<16x1xf32> -> vector<16x1xf32>
    %41 = vector.broadcast %40 : vector<16x1xf32> to vector<16x8xf32>
    %42 = arith.mulf %39, %41 : vector<16x8xf32>
    %43 = arith.truncf %42 : vector<16x8xf32> to vector<16x8xbf16>
    %c0_20 = arith.constant 0 : index
    %c8 = arith.constant 8 : index
    %44 = vector.load %arg9[%c0_20, %c8] : memref<16x32xbf16, #tpu.memory_space<vmem>>, vector<16x8xbf16>
    tpu.vector_store %arg9[%c0_20, %c8], %43 {strides = array<i32>} : memref<16x32xbf16, #tpu.memory_space<vmem>>, vector<16x8xbf16>,
    %45 = vector.extract_strided_slice %8 {offsets = [0, 16], sizes = [16, 8], strides = [1, 1]} : vector<16x32xbf16> to vector<16x8xbf16>
    %46 = vector.extract_strided_slice %3 {offsets = [0, 16], sizes = [8, 8], strides = [1, 1]} : vector<8x32xbf16> to vector<8x8xbf16>
    %cst_21 = arith.constant dense<0.000000e+00> : vector<16x8xf32>
    %47 = tpu.matmul %45, %46, %cst_21 {dimension_numbers = #tpu.dot_dimension_numbers<[1], [1], [0], [0], [0, 0, 1, 0], [], []>} : vector<16x8xbf16>, vector<8x8xbf16>, vector<16x8xf32> -> vector<16x8xf32>
    %cst_22 = arith.constant dense<0xFF800000> : vector<16xf32>
    %48 = vector.multi_reduction <maximumf>, %47, %cst_22 [1] : vector<16x8xf32> to vector<16xf32>
    %49 = vector.shape_cast %48 : vector<16xf32> to vector<16x1xf32>
    %50 = vector.broadcast %49 : vector<16x1xf32> to vector<16x8xf32>
    %51 = arith.subf %47, %50 : vector<16x8xf32>
    %52 = math.exp %51 : vector<16x8xf32>
    %cst_23 = arith.constant dense<0.000000e+00> : vector<16xf32>
    %53 = vector.multi_reduction <add>, %52, %cst_23 [1] : vector<16x8xf32> to vector<16xf32>
    %54 = vector.shape_cast %53 : vector<16xf32> to vector<16x1xf32>
    %55 = arith.truncf %52 : vector<16x8xf32> to vector<16x8xbf16>
    %56 = vector.extract_strided_slice %5 {offsets = [0, 16], sizes = [8, 8], strides = [1, 1]} : vector<8x32xbf16> to vector<8x8xbf16>
    %cst_24 = arith.constant dense<0.000000e+00> : vector<16x8xf32>
    %57 = tpu.matmul %55, %56, %cst_24 {dimension_numbers = #tpu.dot_dimension_numbers<[1], [0], [0], [1], [0, 0, 1, 1], [], []>} : vector<16x8xbf16>, vector<8x8xbf16>, vector<16x8xf32> -> vector<16x8xf32>
    %58 = tpu.reciprocal %54 {approx = true} : vector<16x1xf32> -> vector<16x1xf32>
    %59 = vector.broadcast %58 : vector<16x1xf32> to vector<16x8xf32>
    %60 = arith.mulf %57, %59 : vector<16x8xf32>
    %61 = arith.truncf %60 : vector<16x8xf32> to vector<16x8xbf16>
    %c0_25 = arith.constant 0 : index
    %c16 = arith.constant 16 : index
    %62 = vector.load %arg9[%c0_25, %c16] : memref<16x32xbf16, #tpu.memory_space<vmem>>, vector<16x8xbf16>
    tpu.vector_store %arg9[%c0_25, %c16], %61 {strides = array<i32>} : memref<16x32xbf16, #tpu.memory_space<vmem>>, vector<16x8xbf16>,
    %63 = vector.extract_strided_slice %8 {offsets = [0, 24], sizes = [16, 8], strides = [1, 1]} : vector<16x32xbf16> to vector<16x8xbf16>
    %64 = vector.extract_strided_slice %3 {offsets = [0, 24], sizes = [8, 8], strides = [1, 1]} : vector<8x32xbf16> to vector<8x8xbf16>
    %cst_26 = arith.constant dense<0.000000e+00> : vector<16x8xf32>
    %65 = tpu.matmul %63, %64, %cst_26 {dimension_numbers = #tpu.dot_dimension_numbers<[1], [1], [0], [0], [0, 0, 1, 0], [], []>} : vector<16x8xbf16>, vector<8x8xbf16>, vector<16x8xf32> -> vector<16x8xf32>
    %cst_27 = arith.constant dense<0xFF800000> : vector<16xf32>
    %66 = vector.multi_reduction <maximumf>, %65, %cst_27 [1] : vector<16x8xf32> to vector<16xf32>
    %67 = vector.shape_cast %66 : vector<16xf32> to vector<16x1xf32>
    %68 = vector.broadcast %67 : vector<16x1xf32> to vector<16x8xf32>
    %69 = arith.subf %65, %68 : vector<16x8xf32>
    %70 = math.exp %69 : vector<16x8xf32>
    %cst_28 = arith.constant dense<0.000000e+00> : vector<16xf32>
    %71 = vector.multi_reduction <add>, %70, %cst_28 [1] : vector<16x8xf32> to vector<16xf32>
    %72 = vector.shape_cast %71 : vector<16xf32> to vector<16x1xf32>
    %73 = arith.truncf %70 : vector<16x8xf32> to vector<16x8xbf16>
    %74 = vector.extract_strided_slice %5 {offsets = [0, 24], sizes = [8, 8], strides = [1, 1]} : vector<8x32xbf16> to vector<8x8xbf16>
    %cst_29 = arith.constant dense<0.000000e+00> : vector<16x8xf32>
    %75 = tpu.matmul %73, %74, %cst_29 {dimension_numbers = #tpu.dot_dimension_numbers<[1], [0], [0], [1], [0, 0, 1, 1], [], []>} : vector<16x8xbf16>, vector<8x8xbf16>, vector<16x8xf32> -> vector<16x8xf32>
    %76 = tpu.reciprocal %72 {approx = true} : vector<16x1xf32> -> vector<16x1xf32>
    %77 = vector.broadcast %76 : vector<16x1xf32> to vector<16x8xf32>
    %78 = arith.mulf %75, %77 : vector<16x8xf32>
    %79 = arith.truncf %78 : vector<16x8xf32> to vector<16x8xbf16>
    %c0_30 = arith.constant 0 : index
    %c24 = arith.constant 24 : index
    %80 = vector.load %arg9[%c0_30, %c24] : memref<16x32xbf16, #tpu.memory_space<vmem>>, vector<16x8xbf16>
    tpu.vector_store %arg9[%c0_30, %c24], %79 {strides = array<i32>} : memref<16x32xbf16, #tpu.memory_space<vmem>>, vector<16x8xbf16>,
    %c0_31 = arith.constant 0 : index
    %c0_32 = arith.constant 0 : index
    %81 = vector.load %arg9[%c0_31, %c0_32] : memref<16x32xbf16, #tpu.memory_space<vmem>>, vector<16x32xbf16>
    %c0_33 = arith.constant 0 : index
    %c0_34 = arith.constant 0 : index
    %82 = vector.load %arg6[%c0_33, %c0_34] : memref<32x32xbf16, #tpu.memory_space<vmem>>, vector<32x32xbf16>
    %cst_35 = arith.constant dense<0.000000e+00> : vector<16x32xf32>
    %83 = tpu.matmul %81, %82, %cst_35 {dimension_numbers = #tpu.dot_dimension_numbers<[1], [0], [0], [1], [0, 0, 1, 1], [], []>} : vector<16x32xbf16>, vector<32x32xbf16>, vector<16x32xf32> -> vector<16x32xf32>
    %c0_36 = arith.constant 0 : index
    %c0_37 = arith.constant 0 : index
    %84 = vector.load %arg7[%c0_36, %c0_37] : memref<1x32xf32, #tpu.memory_space<vmem>>, vector<1x32xf32>
    %85 = vector.broadcast %84 : vector<1x32xf32> to vector<16x32xf32>
    %86 = arith.addf %83, %85 : vector<16x32xf32>
    %c0_38 = arith.constant 0 : index
    %c0_39 = arith.constant 0 : index
    %c0_40 = arith.constant 0 : index
    %87 = vector.load %arg8[%c0_38, %c0_39, %c0_40] : memref<1x16x32xf32, #tpu.memory_space<vmem>>, vector<1x16x32xf32>
    %88 = vector.shape_cast %87 : vector<1x16x32xf32> to vector<16x32xf32>
    %89 = vector.shape_cast %86 : vector<16x32xf32> to vector<1x16x32xf32>
    tpu.vector_store %arg8[%c0_38, %c0_39, %c0_40], %89 {strides = array<i32>} : memref<1x16x32xf32, #tpu.memory_space<vmem>>, vector<1x16x32xf32>,
    return
  }
  func.func @transform_0(%arg0: i32, %arg1: i32) -> (i32, i32, i32) {
    %c0_i32 = arith.constant 0 : i32
    %c0_i32_0 = arith.constant 0 : i32
    return %arg0, %arg1, %c0_i32 : i32, i32, i32
  }
  func.func @transform_1(%arg0: i32, %arg1: i32) -> (i32, i32, i32) {
    %c0_i32 = arith.constant 0 : i32
    %c0_i32_0 = arith.constant 0 : i32
    %c0_i32_1 = arith.constant 0 : i32
    return %arg0, %c0_i32, %c0_i32_0 : i32, i32, i32
  }
  func.func @transform_2(%arg0: i32, %arg1: i32) -> (i32, i32, i32) {
    %c0_i32 = arith.constant 0 : i32
    %c0_i32_0 = arith.constant 0 : i32
    %c0_i32_1 = arith.constant 0 : i32
    return %arg0, %c0_i32, %c0_i32_0 : i32, i32, i32
  }
  func.func @transform_3(%arg0: i32, %arg1: i32) -> (i32, i32) {
    %c0_i32 = arith.constant 0 : i32
    %c0_i32_0 = arith.constant 0 : i32
    %c0_i32_1 = arith.constant 0 : i32
    return %c0_i32, %c0_i32_0 : i32, i32
  }
  func.func @transform_4(%arg0: i32, %arg1: i32) -> (i32, i32) {
    %c0_i32 = arith.constant 0 : i32
    %c0_i32_0 = arith.constant 0 : i32
    %c0_i32_1 = arith.constant 0 : i32
    return %c0_i32, %c0_i32_0 : i32, i32
  }
  func.func @transform_5(%arg0: i32, %arg1: i32) -> (i32, i32) {
    %c0_i32 = arith.constant 0 : i32
    %c0_i32_0 = arith.constant 0 : i32
    %c0_i32_1 = arith.constant 0 : i32
    return %c0_i32, %c0_i32_0 : i32, i32
  }
  func.func @transform_6(%arg0: i32, %arg1: i32) -> (i32, i32, i32) {
    %c0_i32 = arith.constant 0 : i32
    %c0_i32_0 = arith.constant 0 : i32
    return %arg0, %arg1, %c0_i32 : i32, i32, i32
  }
}

</mosaic_0001>

<llo_original>
// kernel: tpu_custom_call.1
$region0: #{tpu_custom_call.1}
  #allocation0 [shape = 'u32[]', space=smem, size = 0x4, offset = 0x4, fixed_abs, tag = 'smem constant byte address 0x4 - core index']
  #allocation1 [shape = 'u32[144,128]{1,0:T(1,128)}', space=vmem, size = 0x12000, scoped, tag = 'internal scratch']
  #allocation2 [shape = 'bf16[16,32]{1,0:T(8,128)(2,1)}', space=vmem, size = 0x1000, scoped, tag = 'scratch operand']
  %s0 = inlined_call_operand.hbm [shape: bf16[2,16,32], index: 0, kind: input, shape index: {}]
  %s1 = inlined_call_operand.hbm [shape: bf16[2,8,32], index: 1, kind: input, shape index: {}]
  %s2 = inlined_call_operand.hbm [shape: bf16[2,8,32], index: 2, kind: input, shape index: {}]
  %s3 = inlined_call_operand.hbm [shape: bf16[32,32], index: 3, kind: input, shape index: {}]
  %s4 = inlined_call_operand.hbm [shape: bf16[32,32], index: 4, kind: input, shape index: {}]
  %s5 = inlined_call_operand.vmem [shape: f32[1,32], index: 5, kind: input, shape index: {}]
  %s6 = inlined_call_operand.hbm [shape: f32[2,16,32], index: 6, kind: output, shape index: {}]
  %s7 = sld [smem:[#allocation0]]
  $region77: #{tpu_custom_call.1} parent=0
    _
  %s9 = ssub.s32 1, %s7
  %s10 = scalar_select 0, %s9, %s7
  $region1: #{tpu_custom_call.1} parent=0
    #allocation3 [shape = 'u8[8192]{0}', space=vmem, size = 0x2000, scoped, tag = 'input window, operand 0']
    #allocation4 [shape = 's32[2]{0}', space=sflag, size = 0x8, scoped, tag = 'scoped memory for tpu_custom_call.1']
    #allocation5 [shape = 's32[2]{0}', space=sflag, size = 0x8, scoped, tag = 'scoped memory for tpu_custom_call.1']
    #allocation6 [shape = 'u8[4096]{0}', space=vmem, size = 0x1000, scoped, tag = 'input window, operand 1']
    #allocation7 [shape = 's32[2]{0}', space=sflag, size = 0x8, scoped, tag = 'scoped memory for tpu_custom_call.1']
    #allocation8 [shape = 'u8[4096]{0}', space=vmem, size = 0x1000, scoped, tag = 'input window, operand 2']
    #allocation9 [shape = 'u8[8192]{0}', space=vmem, size = 0x2000, scoped, tag = 'input window, operand 3, single buffered']
    #allocation10 [shape = 's32[1]{0}', space=sflag, size = 0x4, scoped, tag = 'scoped memory for tpu_custom_call.1']
    #allocation11 [shape = 'u8[8192]{0}', space=vmem, size = 0x2000, scoped, tag = 'input window, operand 4, single buffered']
    #allocation12 [shape = 'u8[16384]{0}', space=vmem, size = 0x4000, scoped, tag = 'output window, operand 0']
    %11 = vsyncpa [#allocation4], 0
    %s12 = scalar_lea.sflag [#allocation4], 1
    %13 = vsyncpa %s12, 0
    %14 = vsyncpa [#allocation7], 0
    %s15 = scalar_lea.sflag [#allocation7], 1
    %16 = vsyncpa %s15, 0
    %17 = vsyncpa [#allocation10], 0
    %18 = vsyncpa [#allocation5], 0
    %s19 = scalar_lea.sflag [#allocation5], 1
    %20 = vsyncpa %s19, 0
    loop: start=0, step=1, limit=4
    $region2: #{tpu_custom_call.1} parent=1 // loop_pre_header
      _
    $region3: #{tpu_custom_call.1} parent=1 // loop_header
      %s22 = sphi 0, %s26
      %p23 = scmp.ge.s32.totalorder %s22, 4
      %s29 = sphi 0, %s41
      %s30 = sphi 0, %s37
      %s31 = sphi 0, %s29
      %s32 = sphi 0, %s30
      %s33 = sphi 0, %s31
      %s34 = sphi 0, %s32
      %s46 = sphi 0, %s48
      %s49 = sphi 0, %s46
      %s50 = sphi 0, %s49
      %s66 = sphi 0, %s50
      %s72 = sphi 0, %s74
      %s75 = sphi 0, %s72
      %s76 = sphi 0, %s75
      %s92 = sphi 0, %s76
      %s98 = sphi 0, %s100
      %s101 = sphi 0, %s98
      %s102 = sphi 0, %s101
      %s118 = sphi 0, %s102
      %s122 = sphi 0, %s122
      %s124 = sphi 0, %s122
      %s125 = sphi 0, %s124
      %s139 = sphi 0, %s125
      %s143 = sphi 0, %s143
      %s145 = sphi 0, %s143
      %s146 = sphi 0, %s145
      %s160 = sphi 0, %s146
      %s164 = sphi 0, %s164
      %s166 = sphi 0, %s164
      %s167 = sphi 0, %s166
      %s181 = sphi 0, %s167
      %s189 = sphi 0, %s191
      %s192 = sphi 0, %s189
      %s193 = sphi 0, %s192
      %s209 = sphi 0, %s193
    $region4: #{tpu_custom_call.1} parent=1 // loop_header_branch
      %25 = sbr.rel (%p23) target = $region8
    $region5: #{tpu_custom_call.1} parent=1 // loop_body
      %s27 = ssub.s32 %s22, 1
      %s28 = ssub.s32 %s22, 2
      %s35 = sadd.s32 1, %s30
      %p36 = scmp.ge.s32.totalorder %s35, 1
      %s37 = scalar_select %p36, 0, %s35
      %s38 = sadd.s32 1, %s29
      %s39 = scalar_select %p36, %s38, %s29
      %p40 = scmp.ge.s32.totalorder %s39, 2
      %s41 = scalar_select %p40, 0, %s39
      %s42 = ssub.s32 %s29, %s41
      %s43 = ssub.s32 %s30, %s37
      %s44 = sor.u32 %s42, %s43
      %p45 = scmp.eq.s32.totalorder %s44, 0
      %s47 = sadd.s32 %s46, 1
      %s48 = scalar_select %p45, %s46, %s47
      %p51 = pneg %p45
      %p52 = scmp.eq.s32.totalorder %s22, 1
      %p53 = por %p51, %p52
      %p54 = scmp.ne.s32.totalorder %s46, %s49
      %p55 = scmp.eq.s32.totalorder %s22, 0
      %p56 = por %p54, %p55
      %p57 = scmp.ne.s32.totalorder %s46, %s49
      %p58 = scmp.eq.s32.totalorder %s27, 1
      %p59 = por %p57, %p58
      %p60 = scmp.ne.s32.totalorder %s49, %s50
      %p61 = scmp.eq.s32.totalorder %s27, 0
      %p62 = por %p60, %p61
      %p63 = scmp.ne.s32.totalorder %s49, %s50
      %p64 = scmp.eq.s32.totalorder %s28, 1
      %p65 = por %p63, %p64
      %p67 = scmp.ne.s32.totalorder %s50, %s66
      %p68 = scmp.eq.s32.totalorder %s28, 0
      %p69 = por %p67, %p68
      %s70 = ssub.s32 %s29, %s41
      %p71 = scmp.eq.s32.totalorder %s70, 0
      %s73 = sadd.s32 %s72, 1
      %s74 = scalar_select %p71, %s72, %s73
      %p77 = pneg %p71
      %p78 = scmp.eq.s32.totalorder %s22, 1
      %p79 = por %p77, %p78
      %p80 = scmp.ne.s32.totalorder %s72, %s75
      %p81 = scmp.eq.s32.totalorder %s22, 0
      %p82 = por %p80, %p81
      %p83 = scmp.ne.s32.totalorder %s72, %s75
      %p84 = scmp.eq.s32.totalorder %s27, 1
      %p85 = por %p83, %p84
      %p86 = scmp.ne.s32.totalorder %s75, %s76
      %p87 = scmp.eq.s32.totalorder %s27, 0
      %p88 = por %p86, %p87
      %p89 = scmp.ne.s32.totalorder %s75, %s76
      %p90 = scmp.eq.s32.totalorder %s28, 1
      %p91 = por %p89, %p90
      %p93 = scmp.ne.s32.totalorder %s76, %s92
      %p94 = scmp.eq.s32.totalorder %s28, 0
      %p95 = por %p93, %p94
      %s96 = ssub.s32 %s29, %s41
      %p97 = scmp.eq.s32.totalorder %s96, 0
      %s99 = sadd.s32 %s98, 1
      %s100 = scalar_select %p97, %s98, %s99
      %p103 = pneg %p97
      %p104 = scmp.eq.s32.totalorder %s22, 1
      %p105 = por %p103, %p104
      %p106 = scmp.ne.s32.totalorder %s98, %s101
      %p107 = scmp.eq.s32.totalorder %s22, 0
      %p108 = por %p106, %p107
      %p109 = scmp.ne.s32.totalorder %s98, %s101
      %p110 = scmp.eq.s32.totalorder %s27, 1
      %p111 = por %p109, %p110
      %p112 = scmp.ne.s32.totalorder %s101, %s102
      %p113 = scmp.eq.s32.totalorder %s27, 0
      %p114 = por %p112, %p113
      %p115 = scmp.ne.s32.totalorder %s101, %s102
      %p116 = scmp.eq.s32.totalorder %s28, 1
      %p117 = por %p115, %p116
      %p119 = scmp.ne.s32.totalorder %s102, %s118
      %p120 = scmp.eq.s32.totalorder %s28, 0
      %p121 = por %p119, %p120
      %s123 = sadd.s32 %s122, 1
      %p126 = scmp.eq.s32.totalorder %s22, 1
      %p127 = scmp.ne.s32.totalorder %s122, %s124
      %p128 = scmp.eq.s32.totalorder %s22, 0
      %p129 = por %p127, %p128
      %p130 = scmp.ne.s32.totalorder %s122, %s124
      %p131 = scmp.eq.s32.totalorder %s27, 1
      %p132 = por %p130, %p131
      %p133 = scmp.ne.s32.totalorder %s124, %s125
      %p134 = scmp.eq.s32.totalorder %s27, 0
      %p135 = por %p133, %p134
      %p136 = scmp.ne.s32.totalorder %s124, %s125
      %p137 = scmp.eq.s32.totalorder %s28, 1
      %p138 = por %p136, %p137
      %p140 = scmp.ne.s32.totalorder %s125, %s139
      %p141 = scmp.eq.s32.totalorder %s28, 0
      %p142 = por %p140, %p141
      %s144 = sadd.s32 %s143, 1
      %p147 = scmp.eq.s32.totalorder %s22, 1
      %p148 = scmp.ne.s32.totalorder %s143, %s145
      %p149 = scmp.eq.s32.totalorder %s22, 0
      %p150 = por %p148, %p149
      %p151 = scmp.ne.s32.totalorder %s143, %s145
      %p152 = scmp.eq.s32.totalorder %s27, 1
      %p153 = por %p151, %p152
      %p154 = scmp.ne.s32.totalorder %s145, %s146
      %p155 = scmp.eq.s32.totalorder %s27, 0
      %p156 = por %p154, %p155
      %p157 = scmp.ne.s32.totalorder %s145, %s146
      %p158 = scmp.eq.s32.totalorder %s28, 1
      %p159 = por %p157, %p158
      %p161 = scmp.ne.s32.totalorder %s146, %s160
      %p162 = scmp.eq.s32.totalorder %s28, 0
      %p163 = por %p161, %p162
      %s165 = sadd.s32 %s164, 1
      %p168 = scmp.eq.s32.totalorder %s22, 1
      %p169 = scmp.ne.s32.totalorder %s164, %s166
      %p170 = scmp.eq.s32.totalorder %s22, 0
      %p171 = por %p169, %p170
      %p172 = scmp.ne.s32.totalorder %s164, %s166
      %p173 = scmp.eq.s32.totalorder %s27, 1
      %p174 = por %p172, %p173
      %p175 = scmp.ne.s32.totalorder %s166, %s167
      %p176 = scmp.eq.s32.totalorder %s27, 0
      %p177 = por %p175, %p176
      %p178 = scmp.ne.s32.totalorder %s166, %s167
      %p179 = scmp.eq.s32.totalorder %s28, 1
      %p180 = por %p178, %p179
      %p182 = scmp.ne.s32.totalorder %s167, %s181
      %p183 = scmp.eq.s32.totalorder %s28, 0
      %p184 = por %p182, %p183
      %s185 = ssub.s32 %s29, %s41
      %s186 = ssub.s32 %s30, %s37
      %s187 = sor.u32 %s185, %s186
      %p188 = scmp.eq.s32.totalorder %s187, 0
      %s190 = sadd.s32 %s189, 1
      %s191 = scalar_select %p188, %s189, %s190
      %p194 = pneg %p188
      %p195 = scmp.eq.s32.totalorder %s22, 1
      %p196 = por %p194, %p195
      %p197 = scmp.ne.s32.totalorder %s189, %s192
      %p198 = scmp.eq.s32.totalorder %s22, 0
      %p199 = por %p197, %p198
      %p200 = scmp.ne.s32.totalorder %s189, %s192
      %p201 = scmp.eq.s32.totalorder %s27, 1
      %p202 = por %p200, %p201
      %p203 = scmp.ne.s32.totalorder %s192, %s193
      %p204 = scmp.eq.s32.totalorder %s27, 0
      %p205 = por %p203, %p204
      %p206 = scmp.ne.s32.totalorder %s192, %s193
      %p207 = scmp.eq.s32.totalorder %s28, 1
      %p208 = por %p206, %p207
      %p210 = scmp.ne.s32.totalorder %s193, %s209
      %p211 = scmp.eq.s32.totalorder %s28, 0
      %p212 = por %p210, %p211
      %p213 = scmp.le.s32.totalorder 1, %s22
      %p214 = scmp.lt.s32.totalorder %s22, 3
      %p215 = pnand %p213, %p214
      %p216 = pneg %p215
      // Predicated region
      $region9: #{tpu_custom_call.1} parent=5 // pred_check
        _
      $region10: #{tpu_custom_call.1} parent=5 // pred_check_branch
        %218 = sbr.rel (%p215) target = $region12
      $region11: #{tpu_custom_call.1} parent=5 // pred_region
        %s219 = ssub.s32 %s22, 1
        // Predicated region
        $region13: #{tpu_custom_call.1} parent=11 // pred_check
          %p220 = pneg %p135
        $region14: #{tpu_custom_call.1} parent=11 // pred_check_branch
          %222 = sbr.rel (%p220) target = $region16
        $region15: #{tpu_custom_call.1} parent=11 // pred_region
          %s224 = ssub.s32 256, 256
          %225 = vsyncadd [#allocation10], %s224
          %s226 = sshll.u32 [#allocation9], 4
          %s227 = int_to_ptr.vmem [resolvable:$true] %s226
          %232 = dma.hbm_to_vmem [thread:$0]  %s3, 256, %s227, [#allocation10], 64, 64, 4
        $region16: #{tpu_custom_call.1} parent=11 // pred_fallthru
          _
        // Predicated region
        $region17: #{tpu_custom_call.1} parent=11 // pred_check
          %p233 = pneg %p156
        $region18: #{tpu_custom_call.1} parent=11 // pred_check_branch
          %235 = sbr.rel (%p233) target = $region20
        $region19: #{tpu_custom_call.1} parent=11 // pred_region
          %s237 = ssub.s32 256, 256
          %238 = vsyncadd [#allocation10], %s237
          %s239 = sshll.u32 [#allocation11], 4
          %s240 = int_to_ptr.vmem [resolvable:$true] %s239
          %245 = dma.hbm_to_vmem [thread:$0]  %s4, 256, %s240, [#allocation10], 64, 64, 4
        $region20: #{tpu_custom_call.1} parent=11 // pred_fallthru
          _
        // Predicated region
        $region21: #{tpu_custom_call.1} parent=11 // pred_check
          %p246 = pneg %p177
        $region22: #{tpu_custom_call.1} parent=11 // pred_check_branch
          %248 = sbr.rel (%p246) target = $region24
        $region23: #{tpu_custom_call.1} parent=11 // pred_region
          _
        $region24: #{tpu_custom_call.1} parent=11 // pred_fallthru
          _
      $region12: #{tpu_custom_call.1} parent=5 // pred_fallthru
        _
      %p249 = scmp.lt.s32.totalorder %s22, 2
      // Predicated region
      $region25: #{tpu_custom_call.1} parent=5 // pred_check
        %p250 = pneg %p249
      $region26: #{tpu_custom_call.1} parent=5 // pred_check_branch
        %252 = sbr.rel (%p250) target = $region28
      $region27: #{tpu_custom_call.1} parent=5 // pred_region
        // Predicated region
        $region29: #{tpu_custom_call.1} parent=27 // pred_check
          %p253 = pneg %p56
        $region30: #{tpu_custom_call.1} parent=27 // pred_check_branch
          %255 = sbr.rel (%p253) target = $region32
        $region31: #{tpu_custom_call.1} parent=27 // pred_region
          %s256 = sand.u32 %s46, 1
          %s257 = scalar_lea.sflag [#allocation4], %s256
          %s258 = sand.u32 %s46, 1
          %s259 = smul.addr %s258, 8
          %s260 = scalar_lea.vmem [#allocation3], %s259
          %s261 = smul.u32 2, %s30
          %s263 = ssub.s32 128, 128
          %264 = vsyncadd %s257, %s263
          %s265 = smul.addr %s29, 2
          %s266 = sadd.s32 %s261, %s265
          %s267 = smul.addr %s266, 64
          %s268 = scalar_lea.hbm %s0, %s267
          %s269 = sshll.u32 %s260, 4
          %s270 = int_to_ptr.vmem [resolvable:$true] %s269
          %275 = dma.hbm_to_vmem [thread:$0]  %s268, 128, %s270, %s257, 64, 64, 4
        $region32: #{tpu_custom_call.1} parent=27 // pred_fallthru
          _
        // Predicated region
        $region33: #{tpu_custom_call.1} parent=27 // pred_check
          %p276 = pneg %p82
        $region34: #{tpu_custom_call.1} parent=27 // pred_check_branch
          %278 = sbr.rel (%p276) target = $region36
        $region35: #{tpu_custom_call.1} parent=27 // pred_region
          %s279 = sand.u32 %s22, 1
          %s280 = scalar_lea.sflag [#allocation7], %s279
          %s281 = sand.u32 %s72, 1
          %s282 = smul.addr %s281, 4
          %s283 = scalar_lea.vmem [#allocation6], %s282
          %s285 = ssub.s32 64, 64
          %286 = vsyncadd %s280, %s285
          %s287 = smul.addr %s29, 64
          %s288 = scalar_lea.hbm %s1, %s287
          %s290 = sshll.u32 %s283, 4
          %s291 = int_to_ptr.vmem [resolvable:$true] %s290
          %293 = dma.hbm_to_vmem [thread:$0]  %s288, 64, %s291, %s280
        $region36: #{tpu_custom_call.1} parent=27 // pred_fallthru
          _
        // Predicated region
        $region37: #{tpu_custom_call.1} parent=27 // pred_check
          %p294 = pneg %p108
        $region38: #{tpu_custom_call.1} parent=27 // pred_check_branch
          %296 = sbr.rel (%p294) target = $region40
        $region39: #{tpu_custom_call.1} parent=27 // pred_region
          %s297 = sand.u32 %s22, 1
          %s298 = scalar_lea.sflag [#allocation7], %s297
          %s299 = sand.u32 %s98, 1
          %s300 = smul.addr %s299, 4
          %s301 = scalar_lea.vmem [#allocation8], %s300
          %s303 = ssub.s32 64, 64
          %304 = vsyncadd %s298, %s303
          %s305 = smul.addr %s29, 64
          %s306 = scalar_lea.hbm %s2, %s305
          %s308 = sshll.u32 %s301, 4
          %s309 = int_to_ptr.vmem [resolvable:$true] %s308
          %311 = dma.hbm_to_vmem [thread:$0]  %s306, 64, %s309, %s298
        $region40: #{tpu_custom_call.1} parent=27 // pred_fallthru
          _
      $region28: #{tpu_custom_call.1} parent=5 // pred_fallthru
        _
      %p312 = scmp.le.s32.totalorder 1, %s22
      %p313 = scmp.lt.s32.totalorder %s22, 3
      %p314 = pnand %p312, %p313
      %p315 = pneg %p314
      // Predicated region
      $region41: #{tpu_custom_call.1} parent=5 // pred_check
        _
      $region42: #{tpu_custom_call.1} parent=5 // pred_check_branch
        %317 = sbr.rel (%p314) target = $region44
      $region43: #{tpu_custom_call.1} parent=5 // pred_region
        %s318 = ssub.s32 %s22, 1
        %s319 = sand.u32 %s49, 1
        %s320 = scalar_lea.sflag [#allocation4], %s319
        %s321 = sand.u32 %s49, 1
        %s322 = smul.addr %s321, 8
        %s323 = scalar_lea.vmem [#allocation3], %s322
        // Predicated region
        $region45: #{tpu_custom_call.1} parent=43 // pred_check
          %p324 = pneg %p62
        $region46: #{tpu_custom_call.1} parent=43 // pred_check_branch
          %326 = sbr.rel (%p324) target = $region48
        $region47: #{tpu_custom_call.1} parent=43 // pred_region
          %327 = dma.done %s320, 128
        $region48: #{tpu_custom_call.1} parent=43 // pred_fallthru
          _
        %s328 = sand.u32 %s27, 1
        %s329 = scalar_lea.sflag [#allocation7], %s328
        %s330 = sand.u32 %s75, 1
        %s331 = smul.addr %s330, 4
        %s332 = scalar_lea.vmem [#allocation6], %s331
        // Predicated region
        $region49: #{tpu_custom_call.1} parent=43 // pred_check
          %p333 = pneg %p88
        $region50: #{tpu_custom_call.1} parent=43 // pred_check_branch
          %335 = sbr.rel (%p333) target = $region52
        $region51: #{tpu_custom_call.1} parent=43 // pred_region
          %336 = dma.done %s329, 64
        $region52: #{tpu_custom_call.1} parent=43 // pred_fallthru
          _
        %s337 = sand.u32 %s27, 1
        %s338 = scalar_lea.sflag [#allocation7], %s337
        %s339 = sand.u32 %s101, 1
        %s340 = smul.addr %s339, 4
        %s341 = scalar_lea.vmem [#allocation8], %s340
        // Predicated region
        $region53: #{tpu_custom_call.1} parent=43 // pred_check
          %p342 = pneg %p114
        $region54: #{tpu_custom_call.1} parent=43 // pred_check_branch
          %344 = sbr.rel (%p342) target = $region56
        $region55: #{tpu_custom_call.1} parent=43 // pred_region
          %345 = dma.done %s338, 64
        $region56: #{tpu_custom_call.1} parent=43 // pred_fallthru
          _
        // Predicated region
        $region57: #{tpu_custom_call.1} parent=43 // pred_check
          %p346 = pneg %p135
        $region58: #{tpu_custom_call.1} parent=43 // pred_check_branch
          %348 = sbr.rel (%p346) target = $region60
        $region59: #{tpu_custom_call.1} parent=43 // pred_region
          %349 = dma.done [#allocation10], 256
        $region60: #{tpu_custom_call.1} parent=43 // pred_fallthru
          _
        // Predicated region
        $region61: #{tpu_custom_call.1} parent=43 // pred_check
          %p350 = pneg %p156
        $region62: #{tpu_custom_call.1} parent=43 // pred_check_branch
          %352 = sbr.rel (%p350) target = $region64
        $region63: #{tpu_custom_call.1} parent=43 // pred_region
          %353 = dma.done [#allocation10], 256
        $region64: #{tpu_custom_call.1} parent=43 // pred_fallthru
          _
        %s354 = sand.u32 %s49, 1
        %s355 = scalar_lea.sflag [#allocation4], %s354
        %s356 = sand.u32 %s49, 1
        %s357 = smul.addr %s356, 8
        %s358 = scalar_lea.vmem [#allocation3], %s357
        %p359 = pneg %p62
        %p360 = pneg %p59
        %s361 = sand.u32 %s27, 1
        %s362 = scalar_lea.sflag [#allocation7], %s361
        %s363 = sand.u32 %s75, 1
        %s364 = smul.addr %s363, 4
        %s365 = scalar_lea.vmem [#allocation6], %s364
        %p366 = pneg %p88
        %p367 = pneg %p85
        %s368 = sand.u32 %s27, 1
        %s369 = scalar_lea.sflag [#allocation7], %s368
        %s370 = sand.u32 %s101, 1
        %s371 = smul.addr %s370, 4
        %s372 = scalar_lea.vmem [#allocation8], %s371
        %p373 = pneg %p114
        %p374 = pneg %p111
        %p375 = pneg %p135
        %p376 = pneg %p132
        %p377 = pneg %p156
        %p378 = pneg %p153
        %p379 = pneg %p177
        %p380 = pneg %p174
        %p381 = pneg %p205
        %p382 = pneg %p202
        %s383 = sand.u32 %s192, 1
        %s384 = scalar_lea.sflag [#allocation5], %s383
        %s385 = sand.u32 %s192, 1
        %s386 = smul.addr %s385, 16
        %s387 = scalar_lea.vmem [#allocation12], %s386
        %s388 = smul.u32 2, %s32
        %s389 = smul.u32 2, %s32
        %v391 = vld [vmem:[%s323] sm:$0xf]
        %v392 = vld [vmem:[%s323 + $0x4] sm:$0xf]
        %v393 = vld [vmem:[%s332] sm:$0xf]
        %v394 = vld [vmem:[%s341] sm:$0xf]
        %v395 = vld [vmem:[#allocation9] sm:$0xf]
        %v396 = vld [vmem:[#allocation9 + $0x4] sm:$0xf]
        %v397 = vld [vmem:[#allocation9 + $0x8] sm:$0xf]
        %v398 = vld [vmem:[#allocation9 + $0xc] sm:$0xf]
        %v401 = vunpack.c.l.b16 %v391
        %v402 = vunpack.c.l.b16 %v392
        %v403 = vpack.c.b16 %v402, %v401
        %v408 = vunpack.c.l.b16 %v395
        %v409 = vunpack.c.l.b16 %v396
        %v410 = vunpack.c.l.b16 %v397
        %v411 = vunpack.c.l.b16 %v398
        %v412 = vpack.c.b16 %v409, %v408
        %v413 = vpack.c.b16 %v411, %v410
        %vm416 = vcmask 261120
        %v418 = vsel %vm416, %v403, 0
        %420 = vmatprep.subr.bf16.mxu0 0
        %421 = vmatpush1.bf16.msra.mxu0 0
        %422 = vmatprep.subr.bf16.mxu0 0
        %423 = vmatpush1.bf16.msra.mxu0 0
        %424 = vmatprep.subr.bf16.mxu0 0
        %425 = vmatpush1.bf16.msra.mxu0 0
        %426 = vmatprep.subr.bf16.mxu0 0
        %427 = vmatpush1.bf16.msra.mxu0 0
        %428 = vmatprep.subr.bf16.mxu0 0
        %429 = vmatpush1.bf16.msra.mxu0 0
        %430 = vmatprep.subr.bf16.mxu0 0
        %431 = vmatpush1.bf16.msra.mxu0 0
        %432 = vmatprep.subr.bf16.mxu0 0
        %433 = vmatpush1.bf16.msra.mxu0 %v413
        %434 = vmatprep.subr.bf16.mxu0 0
        %435 = vmatpush1.bf16.msra.mxu0 %v412
        %436 = vmatprep.subr.bf16.mxu0 0
        %437 = vmatpush2.bf16.msra.mxu0 0
        %438 = vmatprep.subr.bf16.mxu0 0
        %439 = vmatpush2.bf16.msra.mxu0 0
        %440 = vmatprep.subr.bf16.mxu0 0
        %441 = vmatpush2.bf16.msra.mxu0 0
        %442 = vmatprep.subr.bf16.mxu0 0
        %443 = vmatpush2.bf16.msra.mxu0 0
        %444 = vmatprep.subr.bf16.mxu0 0
        %445 = vmatpush2.bf16.msra.mxu0 0
        %446 = vmatprep.subr.bf16.mxu0 0
        %447 = vmatpush2.bf16.msra.mxu0 0
        %448 = vmatprep.subr.bf16.mxu0 0
        %449 = vmatpush2.bf16.msra.mxu0 0
        %450 = vmatprep.subr.bf16.mxu0 0
        %451 = vmatpush2.bf16.msra.mxu0 0
        %452 = vmatprep.mubr.bf16.mxu0 0
        %453 = vmatmul.mubr.bf16.gmra.mxu0 %v418
        %v454 = vpop.f32.mrf.mxu0
        %v455 = vadd.f32 0.0, %v454
        %v456 = vpop.f32.mrf.mxu0
        %v457 = vpop.f32.mrf.mxu0
        %v458 = vadd.f32 0.0, %v457
        %v459 = vpop.f32.mrf.mxu0
        %460 = vdwg.mxu0
        %v461 = vpack.c.bf16 %v458, %v455
        %vm462 = vcmask 64512
        %v464 = vsel %vm462, %v461, 0
        %v467 = vsel %vm462, %v393, 0
        %469 = vmatprep.subr.bf16.mxu0 0
        %470 = vmatpush1.bf16.xpose.msra.mxu0 0
        %471 = vmatprep.subr.bf16.mxu0 0
        %472 = vmatpush1.bf16.xpose.msra.mxu0 0
        %473 = vmatprep.subr.bf16.mxu0 0
        %474 = vmatpush1.bf16.xpose.msra.mxu0 0
        %475 = vmatprep.subr.bf16.mxu0 0
        %476 = vmatpush1.bf16.xpose.msra.mxu0 0
        %477 = vmatprep.subr.bf16.mxu0 0
        %478 = vmatpush1.bf16.xpose.msra.mxu0 0
        %479 = vmatprep.subr.bf16.mxu0 0
        %480 = vmatpush1.bf16.xpose.msra.mxu0 0
        %481 = vmatprep.subr.bf16.mxu0 0
        %482 = vmatpush1.bf16.xpose.msra.mxu0 0
        %483 = vmatprep.subr.bf16.mxu0 0
        %484 = vmatpush1.bf16.xpose.msra.mxu0 %v467
        %485 = vmatprep.subr.bf16.mxu0 0
        %486 = vmatpush2.bf16.xpose.msra.mxu0 0
        %487 = vmatprep.subr.bf16.mxu0 0
        %488 = vmatpush2.bf16.xpose.msra.mxu0 0
        %489 = vmatprep.subr.bf16.mxu0 0
        %490 = vmatpush2.bf16.xpose.msra.mxu0 0
        %491 = vmatprep.subr.bf16.mxu0 0
        %492 = vmatpush2.bf16.xpose.msra.mxu0 0
        %493 = vmatprep.subr.bf16.mxu0 0
        %494 = vmatpush2.bf16.xpose.msra.mxu0 0
        %495 = vmatprep.subr.bf16.mxu0 0
        %496 = vmatpush2.bf16.xpose.msra.mxu0 0
        %497 = vmatprep.subr.bf16.mxu0 0
        %498 = vmatpush2.bf16.xpose.msra.mxu0 0
        %499 = vmatprep.subr.bf16.mxu0 0
        %500 = vmatpush2.bf16.xpose.msra.mxu0 0
        %501 = vmatprep.mubr.bf16.mxu0 0
        %502 = vmatmul.mubr.bf16.gmra.mxu0 %v464
        %v503 = vpop.f32.mrf.mxu0
        %v504 = vadd.f32 0.0, %v503
        %v505 = vpop.f32.mrf.mxu0
        %v506 = vpop.f32.mrf.mxu0
        %v507 = vadd.f32 0.0, %v506
        %v508 = vpop.f32.mrf.mxu0
        %509 = vdwg.mxu0
        %v510 = vsel %vm462, %v504, -inf
        %511 = vmax.xlane.f32.xlu0 %v510
        %v512 = vpop.xlane.xlu0 %511
        %v513 = vsel %vm462, %v507, -inf
        %514 = vmax.xlane.f32.xlu0 %v513
        %v515 = vpop.xlane.xlu0 %514
        %v516 = vsub.f32 %v504, %v512
        %v517 = vsub.f32 %v507, %v515
        %v518 = vmul.f32 %v516, 1.442695
        %v519 = vpow.pop %v518
        %v520 = vmul.f32 %v517, 1.442695
        %v521 = vpow.pop %v520
        %v522 = vsel %vm462, %v519, 0.0
        %523 = vadd.xlane.f32.xlu0 %v522
        %v524 = vpop.xlane.xlu0 %523
        %v525 = vsel %vm462, %v521, 0.0
        %526 = vadd.xlane.f32.xlu0 %v525
        %v527 = vpop.xlane.xlu0 %526
        %v528 = vpack.c.bf16 %v521, %v519
        %v530 = vsel %vm462, %v528, 0
        %vm532 = vcmask 1043456
        %v534 = vsel %vm532, %v394, 0
        %536 = vmatprep.subr.bf16.mxu0 0
        %537 = vmatpush1.bf16.msra.mxu0 0
        %538 = vmatprep.subr.bf16.mxu0 0
        %539 = vmatpush1.bf16.msra.mxu0 0
        %540 = vmatprep.subr.bf16.mxu0 0
        %541 = vmatpush1.bf16.msra.mxu0 0
        %542 = vmatprep.subr.bf16.mxu0 0
        %543 = vmatpush1.bf16.msra.mxu0 0
        %544 = vmatprep.subr.bf16.mxu0 0
        %545 = vmatpush1.bf16.msra.mxu0 0
        %546 = vmatprep.subr.bf16.mxu0 0
        %547 = vmatpush1.bf16.msra.mxu0 0
        %548 = vmatprep.subr.bf16.mxu0 0
        %549 = vmatpush1.bf16.msra.mxu0 0
        %550 = vmatprep.subr.bf16.mxu0 0
        %551 = vmatpush1.bf16.msra.mxu0 %v534
        %552 = vmatprep.subr.bf16.mxu0 0
        %553 = vmatpush2.bf16.msra.mxu0 0
        %554 = vmatprep.subr.bf16.mxu0 0
        %555 = vmatpush2.bf16.msra.mxu0 0
        %556 = vmatprep.subr.bf16.mxu0 0
        %557 = vmatpush2.bf16.msra.mxu0 0
        %558 = vmatprep.subr.bf16.mxu0 0
        %559 = vmatpush2.bf16.msra.mxu0 0
        %560 = vmatprep.subr.bf16.mxu0 0
        %561 = vmatpush2.bf16.msra.mxu0 0
        %562 = vmatprep.subr.bf16.mxu0 0
        %563 = vmatpush2.bf16.msra.mxu0 0
        %564 = vmatprep.subr.bf16.mxu0 0
        %565 = vmatpush2.bf16.msra.mxu0 0
        %566 = vmatprep.subr.bf16.mxu0 0
        %567 = vmatpush2.bf16.msra.mxu0 0
        %568 = vmatprep.mubr.bf16.mxu0 0
        %569 = vmatmul.mubr.bf16.gmra.mxu0 %v530
        %v570 = vpop.f32.mrf.mxu0
        %v571 = vadd.f32 0.0, %v570
        %v572 = vpop.f32.mrf.mxu0
        %v573 = vpop.f32.mrf.mxu0
        %v574 = vadd.f32 0.0, %v573
        %v575 = vpop.f32.mrf.mxu0
        %576 = vdwg.mxu0
        %v577 = vrcp.pop %v524
        %v578 = vrcp.pop %v527
        %v579 = vmul.f32 %v571, %v577
        %v580 = vmul.f32 %v574, %v578
        %v581 = vpack.c.bf16 %v580, %v579
        %v583 = vunpack.c.l.b16 %v581
        %v584 = vunpack.c.h.b16 %v581
        %v585 = vpack.c.b16 %v583, %v583
        %v586 = vpack.c.b16 %v584, %v584
        %vm589 = vcmask 60416
        %590 = vst.msk [vmem:[#allocation2] sm:$0xf] %vm589, %v585
        %591 = vst.msk [vmem:[#allocation2 + $0x4] sm:$0xf] %vm589, %v586
        %593 = vrot.lane.b32.xlu0 %v461, 120
        %v594 = vpop.permute.xlu0 %593
        %v596 = vunpack.c.l.b16 %v393
        %v597 = vpack.c.b16 %v596, %v596
        %598 = vrot.lane.b32.xlu0 %v597, 120
        %v599 = vpop.permute.xlu0 %598
        %v601 = vsel %vm462, %v594, 0
        %v604 = vsel %vm462, %v599, 0
        %606 = vmatprep.subr.bf16.mxu0 0
        %607 = vmatpush1.bf16.xpose.msra.mxu0 0
        %608 = vmatprep.subr.bf16.mxu0 0
        %609 = vmatpush1.bf16.xpose.msra.mxu0 0
        %610 = vmatprep.subr.bf16.mxu0 0
        %611 = vmatpush1.bf16.xpose.msra.mxu0 0
        %612 = vmatprep.subr.bf16.mxu0 0
        %613 = vmatpush1.bf16.xpose.msra.mxu0 0
        %614 = vmatprep.subr.bf16.mxu0 0
        %615 = vmatpush1.bf16.xpose.msra.mxu0 0
        %616 = vmatprep.subr.bf16.mxu0 0
        %617 = vmatpush1.bf16.xpose.msra.mxu0 0
        %618 = vmatprep.subr.bf16.mxu0 0
        %619 = vmatpush1.bf16.xpose.msra.mxu0 0
        %620 = vmatprep.subr.bf16.mxu0 0
        %621 = vmatpush1.bf16.xpose.msra.mxu0 %v604
        %622 = vmatprep.subr.bf16.mxu0 0
        %623 = vmatpush2.bf16.xpose.msra.mxu0 0
        %624 = vmatprep.subr.bf16.mxu0 0
        %625 = vmatpush2.bf16.xpose.msra.mxu0 0
        %626 = vmatprep.subr.bf16.mxu0 0
        %627 = vmatpush2.bf16.xpose.msra.mxu0 0
        %628 = vmatprep.subr.bf16.mxu0 0
        %629 = vmatpush2.bf16.xpose.msra.mxu0 0
        %630 = vmatprep.subr.bf16.mxu0 0
        %631 = vmatpush2.bf16.xpose.msra.mxu0 0
        %632 = vmatprep.subr.bf16.mxu0 0
        %633 = vmatpush2.bf16.xpose.msra.mxu0 0
        %634 = vmatprep.subr.bf16.mxu0 0
        %635 = vmatpush2.bf16.xpose.msra.mxu0 0
        %636 = vmatprep.subr.bf16.mxu0 0
        %637 = vmatpush2.bf16.xpose.msra.mxu0 0
        %638 = vmatprep.mubr.bf16.mxu0 0
        %639 = vmatmul.mubr.bf16.gmra.mxu0 %v601
        %v640 = vpop.f32.mrf.mxu0
        %v641 = vadd.f32 0.0, %v640
        %v642 = vpop.f32.mrf.mxu0
        %v643 = vpop.f32.mrf.mxu0
        %v644 = vadd.f32 0.0, %v643
        %v645 = vpop.f32.mrf.mxu0
        %646 = vdwg.mxu0
        %v647 = vsel %vm462, %v641, -inf
        %648 = vmax.xlane.f32.xlu0 %v647
        %v649 = vpop.xlane.xlu0 %648
        %v650 = vsel %vm462, %v644, -inf
        %651 = vmax.xlane.f32.xlu0 %v650
        %v652 = vpop.xlane.xlu0 %651
        %v653 = vsub.f32 %v641, %v649
        %v654 = vsub.f32 %v644, %v652
        %v655 = vmul.f32 %v653, 1.442695
        %v656 = vpow.pop %v655
        %v657 = vmul.f32 %v654, 1.442695
        %v658 = vpow.pop %v657
        %v659 = vsel %vm462, %v656, 0.0
        %660 = vadd.xlane.f32.xlu0 %v659
        %v661 = vpop.xlane.xlu0 %660
        %v662 = vsel %vm462, %v658, 0.0
        %663 = vadd.xlane.f32.xlu0 %v662
        %v664 = vpop.xlane.xlu0 %663
        %v665 = vpack.c.bf16 %v658, %v656
        %v667 = vunpack.c.l.b16 %v394
        %v668 = vpack.c.b16 %v667, %v667
        %669 = vrot.lane.b32.xlu0 %v668, 120
        %v670 = vpop.permute.xlu0 %669
        %v672 = vsel %vm462, %v665, 0
        %v675 = vsel %vm532, %v670, 0
        %677 = vmatprep.subr.bf16.mxu0 0
        %678 = vmatpush1.bf16.msra.mxu0 0
        %679 = vmatprep.subr.bf16.mxu0 0
        %680 = vmatpush1.bf16.msra.mxu0 0
        %681 = vmatprep.subr.bf16.mxu0 0
        %682 = vmatpush1.bf16.msra.mxu0 0
        %683 = vmatprep.subr.bf16.mxu0 0
        %684 = vmatpush1.bf16.msra.mxu0 0
        %685 = vmatprep.subr.bf16.mxu0 0
        %686 = vmatpush1.bf16.msra.mxu0 0
        %687 = vmatprep.subr.bf16.mxu0 0
        %688 = vmatpush1.bf16.msra.mxu0 0
        %689 = vmatprep.subr.bf16.mxu0 0
        %690 = vmatpush1.bf16.msra.mxu0 0
        %691 = vmatprep.subr.bf16.mxu0 0
        %692 = vmatpush1.bf16.msra.mxu0 %v675
        %693 = vmatprep.subr.bf16.mxu0 0
        %694 = vmatpush2.bf16.msra.mxu0 0
        %695 = vmatprep.subr.bf16.mxu0 0
        %696 = vmatpush2.bf16.msra.mxu0 0
        %697 = vmatprep.subr.bf16.mxu0 0
        %698 = vmatpush2.bf16.msra.mxu0 0
        %699 = vmatprep.subr.bf16.mxu0 0
        %700 = vmatpush2.bf16.msra.mxu0 0
        %701 = vmatprep.subr.bf16.mxu0 0
        %702 = vmatpush2.bf16.msra.mxu0 0
        %703 = vmatprep.subr.bf16.mxu0 0
        %704 = vmatpush2.bf16.msra.mxu0 0
        %705 = vmatprep.subr.bf16.mxu0 0
        %706 = vmatpush2.bf16.msra.mxu0 0
        %707 = vmatprep.subr.bf16.mxu0 0
        %708 = vmatpush2.bf16.msra.mxu0 0
        %709 = vmatprep.mubr.bf16.mxu0 0
        %710 = vmatmul.mubr.bf16.gmra.mxu0 %v672
        %v711 = vpop.f32.mrf.mxu0
        %v712 = vadd.f32 0.0, %v711
        %v713 = vpop.f32.mrf.mxu0
        %v714 = vpop.f32.mrf.mxu0
        %v715 = vadd.f32 0.0, %v714
        %v716 = vpop.f32.mrf.mxu0
        %717 = vdwg.mxu0
        %v718 = vrcp.pop %v661
        %v719 = vrcp.pop %v664
        %v720 = vmul.f32 %v712, %v718
        %v721 = vmul.f32 %v715, %v719
        %v722 = vpack.c.bf16 %v721, %v720
        %v724 = vunpack.c.l.b16 %v722
        %v725 = vunpack.c.h.b16 %v722
        %v726 = vpack.c.b16 %v724, %v724
        %v727 = vpack.c.b16 %v725, %v725
        %728 = vrot.lane.b32.xlu0 %v726, 8
        %v729 = vpop.permute.xlu0 %728
        %730 = vrot.lane.b32.xlu0 %v727, 8
        %v731 = vpop.permute.xlu0 %730
        %vm734 = vcmask 126016
        %735 = vst.msk [vmem:[#allocation2] sm:$0xf] %vm734, %v729
        %736 = vst.msk [vmem:[#allocation2 + $0x4] sm:$0xf] %vm734, %v731
        %737 = vrot.lane.b32.xlu0 %v461, 112
        %v738 = vpop.permute.xlu0 %737
        %739 = vrot.lane.b32.xlu0 %v597, 112
        %v740 = vpop.permute.xlu0 %739
        %v742 = vsel %vm462, %v738, 0
        %v745 = vsel %vm462, %v740, 0
        %747 = vmatprep.subr.bf16.mxu0 0
        %748 = vmatpush1.bf16.xpose.msra.mxu0 0
        %749 = vmatprep.subr.bf16.mxu0 0
        %750 = vmatpush1.bf16.xpose.msra.mxu0 0
        %751 = vmatprep.subr.bf16.mxu0 0
        %752 = vmatpush1.bf16.xpose.msra.mxu0 0
        %753 = vmatprep.subr.bf16.mxu0 0
        %754 = vmatpush1.bf16.xpose.msra.mxu0 0
        %755 = vmatprep.subr.bf16.mxu0 0
        %756 = vmatpush1.bf16.xpose.msra.mxu0 0
        %757 = vmatprep.subr.bf16.mxu0 0
        %758 = vmatpush1.bf16.xpose.msra.mxu0 0
        %759 = vmatprep.subr.bf16.mxu0 0
        %760 = vmatpush1.bf16.xpose.msra.mxu0 0
        %761 = vmatprep.subr.bf16.mxu0 0
        %762 = vmatpush1.bf16.xpose.msra.mxu0 %v745
        %763 = vmatprep.subr.bf16.mxu0 0
        %764 = vmatpush2.bf16.xpose.msra.mxu0 0
        %765 = vmatprep.subr.bf16.mxu0 0
        %766 = vmatpush2.bf16.xpose.msra.mxu0 0
        %767 = vmatprep.subr.bf16.mxu0 0
        %768 = vmatpush2.bf16.xpose.msra.mxu0 0
        %769 = vmatprep.subr.bf16.mxu0 0
        %770 = vmatpush2.bf16.xpose.msra.mxu0 0
        %771 = vmatprep.subr.bf16.mxu0 0
        %772 = vmatpush2.bf16.xpose.msra.mxu0 0
        %773 = vmatprep.subr.bf16.mxu0 0
        %774 = vmatpush2.bf16.xpose.msra.mxu0 0
        %775 = vmatprep.subr.bf16.mxu0 0
        %776 = vmatpush2.bf16.xpose.msra.mxu0 0
        %777 = vmatprep.subr.bf16.mxu0 0
        %778 = vmatpush2.bf16.xpose.msra.mxu0 0
        %779 = vmatprep.mubr.bf16.mxu0 0
        %780 = vmatmul.mubr.bf16.gmra.mxu0 %v742
        %v781 = vpop.f32.mrf.mxu0
        %v782 = vadd.f32 0.0, %v781
        %v783 = vpop.f32.mrf.mxu0
        %v784 = vpop.f32.mrf.mxu0
        %v785 = vadd.f32 0.0, %v784
        %v786 = vpop.f32.mrf.mxu0
        %787 = vdwg.mxu0
        %v788 = vsel %vm462, %v782, -inf
        %789 = vmax.xlane.f32.xlu0 %v788
        %v790 = vpop.xlane.xlu0 %789
        %v791 = vsel %vm462, %v785, -inf
        %792 = vmax.xlane.f32.xlu0 %v791
        %v793 = vpop.xlane.xlu0 %792
        %v794 = vsub.f32 %v782, %v790
        %v795 = vsub.f32 %v785, %v793
        %v796 = vmul.f32 %v794, 1.442695
        %v797 = vpow.pop %v796
        %v798 = vmul.f32 %v795, 1.442695
        %v799 = vpow.pop %v798
        %v800 = vsel %vm462, %v797, 0.0
        %801 = vadd.xlane.f32.xlu0 %v800
        %v802 = vpop.xlane.xlu0 %801
        %v803 = vsel %vm462, %v799, 0.0
        %804 = vadd.xlane.f32.xlu0 %v803
        %v805 = vpop.xlane.xlu0 %804
        %v806 = vpack.c.bf16 %v799, %v797
        %807 = vrot.lane.b32.xlu0 %v668, 112
        %v808 = vpop.permute.xlu0 %807
        %v810 = vsel %vm462, %v806, 0
        %v813 = vsel %vm532, %v808, 0
        %815 = vmatprep.subr.bf16.mxu0 0
        %816 = vmatpush1.bf16.msra.mxu0 0
        %817 = vmatprep.subr.bf16.mxu0 0
        %818 = vmatpush1.bf16.msra.mxu0 0
        %819 = vmatprep.subr.bf16.mxu0 0
        %820 = vmatpush1.bf16.msra.mxu0 0
        %821 = vmatprep.subr.bf16.mxu0 0
        %822 = vmatpush1.bf16.msra.mxu0 0
        %823 = vmatprep.subr.bf16.mxu0 0
        %824 = vmatpush1.bf16.msra.mxu0 0
        %825 = vmatprep.subr.bf16.mxu0 0
        %826 = vmatpush1.bf16.msra.mxu0 0
        %827 = vmatprep.subr.bf16.mxu0 0
        %828 = vmatpush1.bf16.msra.mxu0 0
        %829 = vmatprep.subr.bf16.mxu0 0
        %830 = vmatpush1.bf16.msra.mxu0 %v813
        %831 = vmatprep.subr.bf16.mxu0 0
        %832 = vmatpush2.bf16.msra.mxu0 0
        %833 = vmatprep.subr.bf16.mxu0 0
        %834 = vmatpush2.bf16.msra.mxu0 0
        %835 = vmatprep.subr.bf16.mxu0 0
        %836 = vmatpush2.bf16.msra.mxu0 0
        %837 = vmatprep.subr.bf16.mxu0 0
        %838 = vmatpush2.bf16.msra.mxu0 0
        %839 = vmatprep.subr.bf16.mxu0 0
        %840 = vmatpush2.bf16.msra.mxu0 0
        %841 = vmatprep.subr.bf16.mxu0 0
        %842 = vmatpush2.bf16.msra.mxu0 0
        %843 = vmatprep.subr.bf16.mxu0 0
        %844 = vmatpush2.bf16.msra.mxu0 0
        %845 = vmatprep.subr.bf16.mxu0 0
        %846 = vmatpush2.bf16.msra.mxu0 0
        %847 = vmatprep.mubr.bf16.mxu0 0
        %848 = vmatmul.mubr.bf16.gmra.mxu0 %v810
        %v849 = vpop.f32.mrf.mxu0
        %v850 = vadd.f32 0.0, %v849
        %v851 = vpop.f32.mrf.mxu0
        %v852 = vpop.f32.mrf.mxu0
        %v853 = vadd.f32 0.0, %v852
        %v854 = vpop.f32.mrf.mxu0
        %855 = vdwg.mxu0
        %v856 = vrcp.pop %v802
        %v857 = vrcp.pop %v805
        %v858 = vmul.f32 %v850, %v856
        %v859 = vmul.f32 %v853, %v857
        %v860 = vpack.c.bf16 %v859, %v858
        %v862 = vunpack.c.l.b16 %v860
        %v863 = vunpack.c.h.b16 %v860
        %v864 = vpack.c.b16 %v862, %v862
        %v865 = vpack.c.b16 %v863, %v863
        %866 = vrot.lane.b32.xlu0 %v864, 16
        %v867 = vpop.permute.xlu0 %866
        %868 = vrot.lane.b32.xlu0 %v865, 16
        %v869 = vpop.permute.xlu0 %868
        %vm872 = vcmask 191616
        %873 = vst.msk [vmem:[#allocation2] sm:$0xf] %vm872, %v867
        %874 = vst.msk [vmem:[#allocation2 + $0x4] sm:$0xf] %vm872, %v869
        %875 = vrot.lane.b32.xlu0 %v461, 104
        %v876 = vpop.permute.xlu0 %875
        %877 = vrot.lane.b32.xlu0 %v597, 104
        %v878 = vpop.permute.xlu0 %877
        %v880 = vsel %vm462, %v876, 0
        %v883 = vsel %vm462, %v878, 0
        %885 = vmatprep.subr.bf16.mxu0 0
        %886 = vmatpush1.bf16.xpose.msra.mxu0 0
        %887 = vmatprep.subr.bf16.mxu0 0
        %888 = vmatpush1.bf16.xpose.msra.mxu0 0
        %889 = vmatprep.subr.bf16.mxu0 0
        %890 = vmatpush1.bf16.xpose.msra.mxu0 0
        %891 = vmatprep.subr.bf16.mxu0 0
        %892 = vmatpush1.bf16.xpose.msra.mxu0 0
        %893 = vmatprep.subr.bf16.mxu0 0
        %894 = vmatpush1.bf16.xpose.msra.mxu0 0
        %895 = vmatprep.subr.bf16.mxu0 0
        %896 = vmatpush1.bf16.xpose.msra.mxu0 0
        %897 = vmatprep.subr.bf16.mxu0 0
        %898 = vmatpush1.bf16.xpose.msra.mxu0 0
        %899 = vmatprep.subr.bf16.mxu0 0
        %900 = vmatpush1.bf16.xpose.msra.mxu0 %v883
        %901 = vmatprep.subr.bf16.mxu0 0
        %902 = vmatpush2.bf16.xpose.msra.mxu0 0
        %903 = vmatprep.subr.bf16.mxu0 0
        %904 = vmatpush2.bf16.xpose.msra.mxu0 0
        %905 = vmatprep.subr.bf16.mxu0 0
        %906 = vmatpush2.bf16.xpose.msra.mxu0 0
        %907 = vmatprep.subr.bf16.mxu0 0
        %908 = vmatpush2.bf16.xpose.msra.mxu0 0
        %909 = vmatprep.subr.bf16.mxu0 0
        %910 = vmatpush2.bf16.xpose.msra.mxu0 0
        %911 = vmatprep.subr.bf16.mxu0 0
        %912 = vmatpush2.bf16.xpose.msra.mxu0 0
        %913 = vmatprep.subr.bf16.mxu0 0
        %914 = vmatpush2.bf16.xpose.msra.mxu0 0
        %915 = vmatprep.subr.bf16.mxu0 0
        %916 = vmatpush2.bf16.xpose.msra.mxu0 0
        %917 = vmatprep.mubr.bf16.mxu0 0
        %918 = vmatmul.mubr.bf16.gmra.mxu0 %v880
        %v919 = vpop.f32.mrf.mxu0
        %v920 = vadd.f32 0.0, %v919
        %v921 = vpop.f32.mrf.mxu0
        %v922 = vpop.f32.mrf.mxu0
        %v923 = vadd.f32 0.0, %v922
        %v924 = vpop.f32.mrf.mxu0
        %925 = vdwg.mxu0
        %v926 = vsel %vm462, %v920, -inf
        %927 = vmax.xlane.f32.xlu0 %v926
        %v928 = vpop.xlane.xlu0 %927
        %v929 = vsel %vm462, %v923, -inf
        %930 = vmax.xlane.f32.xlu0 %v929
        %v931 = vpop.xlane.xlu0 %930
        %v932 = vsub.f32 %v920, %v928
        %v933 = vsub.f32 %v923, %v931
        %v934 = vmul.f32 %v932, 1.442695
        %v935 = vpow.pop %v934
        %v936 = vmul.f32 %v933, 1.442695
        %v937 = vpow.pop %v936
        %v938 = vsel %vm462, %v935, 0.0
        %939 = vadd.xlane.f32.xlu0 %v938
        %v940 = vpop.xlane.xlu0 %939
        %v941 = vsel %vm462, %v937, 0.0
        %942 = vadd.xlane.f32.xlu0 %v941
        %v943 = vpop.xlane.xlu0 %942
        %v944 = vpack.c.bf16 %v937, %v935
        %945 = vrot.lane.b32.xlu0 %v668, 104
        %v946 = vpop.permute.xlu0 %945
        %v948 = vsel %vm462, %v944, 0
        %v951 = vsel %vm532, %v946, 0
        %953 = vmatprep.subr.bf16.mxu0 0
        %954 = vmatpush1.bf16.msra.mxu0 0
        %955 = vmatprep.subr.bf16.mxu0 0
        %956 = vmatpush1.bf16.msra.mxu0 0
        %957 = vmatprep.subr.bf16.mxu0 0
        %958 = vmatpush1.bf16.msra.mxu0 0
        %959 = vmatprep.subr.bf16.mxu0 0
        %960 = vmatpush1.bf16.msra.mxu0 0
        %961 = vmatprep.subr.bf16.mxu0 0
        %962 = vmatpush1.bf16.msra.mxu0 0
        %963 = vmatprep.subr.bf16.mxu0 0
        %964 = vmatpush1.bf16.msra.mxu0 0
        %965 = vmatprep.subr.bf16.mxu0 0
        %966 = vmatpush1.bf16.msra.mxu0 0
        %967 = vmatprep.subr.bf16.mxu0 0
        %968 = vmatpush1.bf16.msra.mxu0 %v951
        %969 = vmatprep.subr.bf16.mxu0 0
        %970 = vmatpush2.bf16.msra.mxu0 0
        %971 = vmatprep.subr.bf16.mxu0 0
        %972 = vmatpush2.bf16.msra.mxu0 0
        %973 = vmatprep.subr.bf16.mxu0 0
        %974 = vmatpush2.bf16.msra.mxu0 0
        %975 = vmatprep.subr.bf16.mxu0 0
        %976 = vmatpush2.bf16.msra.mxu0 0
        %977 = vmatprep.subr.bf16.mxu0 0
        %978 = vmatpush2.bf16.msra.mxu0 0
        %979 = vmatprep.subr.bf16.mxu0 0
        %980 = vmatpush2.bf16.msra.mxu0 0
        %981 = vmatprep.subr.bf16.mxu0 0
        %982 = vmatpush2.bf16.msra.mxu0 0
        %983 = vmatprep.subr.bf16.mxu0 0
        %984 = vmatpush2.bf16.msra.mxu0 0
        %985 = vmatprep.mubr.bf16.mxu0 0
        %986 = vmatmul.mubr.bf16.gmra.mxu0 %v948
        %v987 = vpop.f32.mrf.mxu0
        %v988 = vadd.f32 0.0, %v987
        %v989 = vpop.f32.mrf.mxu0
        %v990 = vpop.f32.mrf.mxu0
        %v991 = vadd.f32 0.0, %v990
        %v992 = vpop.f32.mrf.mxu0
        %993 = vdwg.mxu0
        %v994 = vrcp.pop %v940
        %v995 = vrcp.pop %v943
        %v996 = vmul.f32 %v988, %v994
        %v997 = vmul.f32 %v991, %v995
        %v998 = vpack.c.bf16 %v997, %v996
        %v1000 = vunpack.c.l.b16 %v998
        %v1001 = vunpack.c.h.b16 %v998
        %v1002 = vpack.c.b16 %v1000, %v1000
        %v1003 = vpack.c.b16 %v1001, %v1001
        %1004 = vrot.lane.b32.xlu0 %v1002, 24
        %v1005 = vpop.permute.xlu0 %1004
        %1006 = vrot.lane.b32.xlu0 %v1003, 24
        %v1007 = vpop.permute.xlu0 %1006
        %vm1010 = vcmask 257216
        %1011 = vst.msk [vmem:[#allocation2] sm:$0xf] %vm1010, %v1005
        %1012 = vst.msk [vmem:[#allocation2 + $0x4] sm:$0xf] %vm1010, %v1007
        %v1013 = vld [vmem:[#allocation2] sm:$0xf]
        %v1014 = vld [vmem:[#allocation2 + $0x4] sm:$0xf]
        %v1015 = vld [vmem:[#allocation11] sm:$0xf]
        %v1016 = vld [vmem:[#allocation11 + $0x4] sm:$0xf]
        %v1017 = vld [vmem:[#allocation11 + $0x8] sm:$0xf]
        %v1018 = vld [vmem:[#allocation11 + $0xc] sm:$0xf]
        %v1019 = vld [vmem:[%s5] sm:$0x1]
        %v1021 = vlaneseq
        %v1022 = vshrl.u32 %v1021, 7
        %v1023 = vsub.s32 0, %v1022
        %v1024 = vrot.slane %v1019, %v1023
        %v1028 = vunpack.c.l.b16 %v1013
        %v1029 = vunpack.c.l.b16 %v1014
        %v1030 = vpack.c.b16 %v1029, %v1028
        %v1035 = vunpack.c.l.b16 %v1015
        %v1036 = vunpack.c.l.b16 %v1016
        %v1037 = vunpack.c.l.b16 %v1017
        %v1038 = vunpack.c.l.b16 %v1018
        %v1039 = vpack.c.b16 %v1036, %v1035
        %v1040 = vpack.c.b16 %v1038, %v1037
        %v1044 = vsel %vm416, %v1030, 0
        %1046 = vmatprep.subr.bf16.mxu0 0
        %1047 = vmatpush1.bf16.msra.mxu0 0
        %1048 = vmatprep.subr.bf16.mxu0 0
        %1049 = vmatpush1.bf16.msra.mxu0 0
        %1050 = vmatprep.subr.bf16.mxu0 0
        %1051 = vmatpush1.bf16.msra.mxu0 0
        %1052 = vmatprep.subr.bf16.mxu0 0
        %1053 = vmatpush1.bf16.msra.mxu0 0
        %1054 = vmatprep.subr.bf16.mxu0 0
        %1055 = vmatpush1.bf16.msra.mxu0 0
        %1056 = vmatprep.subr.bf16.mxu0 0
        %1057 = vmatpush1.bf16.msra.mxu0 0
        %1058 = vmatprep.subr.bf16.mxu0 0
        %1059 = vmatpush1.bf16.msra.mxu0 %v1040
        %1060 = vmatprep.subr.bf16.mxu0 0
        %1061 = vmatpush1.bf16.msra.mxu0 %v1039
        %1062 = vmatprep.subr.bf16.mxu0 0
        %1063 = vmatpush2.bf16.msra.mxu0 0
        %1064 = vmatprep.subr.bf16.mxu0 0
        %1065 = vmatpush2.bf16.msra.mxu0 0
        %1066 = vmatprep.subr.bf16.mxu0 0
        %1067 = vmatpush2.bf16.msra.mxu0 0
        %1068 = vmatprep.subr.bf16.mxu0 0
        %1069 = vmatpush2.bf16.msra.mxu0 0
        %1070 = vmatprep.subr.bf16.mxu0 0
        %1071 = vmatpush2.bf16.msra.mxu0 0
        %1072 = vmatprep.subr.bf16.mxu0 0
        %1073 = vmatpush2.bf16.msra.mxu0 0
        %1074 = vmatprep.subr.bf16.mxu0 0
        %1075 = vmatpush2.bf16.msra.mxu0 0
        %1076 = vmatprep.subr.bf16.mxu0 0
        %1077 = vmatpush2.bf16.msra.mxu0 0
        %1078 = vmatprep.mubr.bf16.mxu0 0
        %1079 = vmatmul.mubr.bf16.gmra.mxu0 %v1044
        %v1080 = vpop.f32.mrf.mxu0
        %v1081 = vadd.f32 %v1024, %v1080
        %v1082 = vpop.f32.mrf.mxu0
        %v1083 = vpop.f32.mrf.mxu0
        %v1084 = vadd.f32 %v1024, %v1083
        %v1085 = vpop.f32.mrf.mxu0
        %1086 = vdwg.mxu0
        %1087 = vst.msk [vmem:[%s387] sm:$0xff] %vm416, %v1081
        %1088 = vst.msk [vmem:[%s387 + $0x8] sm:$0xff] %vm416, %v1084
        %s1089 = sand.u32 %s192, 1
        %s1090 = scalar_lea.sflag [#allocation5], %s1089
        %s1091 = sand.u32 %s192, 1
        %s1092 = smul.addr %s1091, 16
        %s1093 = scalar_lea.vmem [#allocation12], %s1092
        // Predicated region
        $region65: #{tpu_custom_call.1} parent=43 // pred_check
          %p1094 = pneg %p202
        $region66: #{tpu_custom_call.1} parent=43 // pred_check_branch
          %1096 = sbr.rel (%p1094) target = $region68
        $region67: #{tpu_custom_call.1} parent=43 // pred_region
          %s1097 = smul.u32 2, %s32
          %s1099 = ssub.s32 256, 256
          %1100 = vsyncadd %s1090, %s1099
          %s1101 = smul.addr %s31, 2
          %s1102 = sadd.s32 %s1097, %s1101
          %s1103 = smul.addr %s1102, 128
          %s1104 = scalar_lea.hbm %s6, %s1103
          %s1105 = sshll.u32 %s1093, 4
          %s1106 = int_to_ptr.vmem [resolvable:$true] %s1105
          %1111 = dma.vmem_to_hbm [thread:$0]  %s1106, 256, %s1104, %s1090, 128, 128, 8
        $region68: #{tpu_custom_call.1} parent=43 // pred_fallthru
          _
      $region44: #{tpu_custom_call.1} parent=5 // pred_fallthru
        _
      %p1112 = scmp.le.s32.totalorder 2, %s22
      // Predicated region
      $region69: #{tpu_custom_call.1} parent=5 // pred_check
        %p1113 = pneg %p1112
      $region70: #{tpu_custom_call.1} parent=5 // pred_check_branch
        %1115 = sbr.rel (%p1113) target = $region72
      $region71: #{tpu_custom_call.1} parent=5 // pred_region
        %s1116 = ssub.s32 %s22, 2
        // Predicated region
        $region73: #{tpu_custom_call.1} parent=71 // pred_check
          %p1117 = pneg %p208
        $region74: #{tpu_custom_call.1} parent=71 // pred_check_branch
          %1119 = sbr.rel (%p1117) target = $region76
        $region75: #{tpu_custom_call.1} parent=71 // pred_region
          %s1120 = sand.u32 %s193, 1
          %s1121 = scalar_lea.sflag [#allocation5], %s1120
          %s1122 = sand.u32 %s193, 1
          %s1123 = smul.addr %s1122, 16
          %s1124 = scalar_lea.vmem [#allocation12], %s1123
          %1125 = dma.done %s1121, 256
        $region76: #{tpu_custom_call.1} parent=71 // pred_fallthru
          _
      $region72: #{tpu_custom_call.1} parent=5 // pred_fallthru
        _
    $region6: #{tpu_custom_call.1} parent=1 // loop_footer
      %s26 = sadd.s32 1, %s22
    $region7: #{tpu_custom_call.1} parent=1 // loop_footer_branch
      %21 = sbr.rel target = $region3
    $region8: #{tpu_custom_call.1} parent=1 // loop_exit
      _
    %1126 = vsyncpa [#allocation4], 1
    %s1127 = scalar_lea.sflag [#allocation4], 1
    %1128 = vsyncpa %s1127, 1
    %1129 = vsyncpa [#allocation7], 1
    %s1130 = scalar_lea.sflag [#allocation7], 1
    %1131 = vsyncpa %s1130, 1
    %1132 = vsyncpa [#allocation10], 1
    %1133 = vsyncpa [#allocation5], 1
    %s1134 = scalar_lea.sflag [#allocation5], 1
    %1135 = vsyncpa %s1134, 1

// kernel: tpu_custom_call.1
$region0: #{tpu_custom_call.1}
  #allocation0 [shape = 'u32[]', space=smem, size = 0x4, offset = 0x4, fixed_abs, tag = 'smem constant byte address 0x4 - core index']
  #allocation1 [shape = 'u32[144,128]{1,0:T(1,128)}', space=vmem, size = 0x12000, scoped, tag = 'internal scratch']
  #allocation2 [shape = 'bf16[16,32]{1,0:T(8,128)(2,1)}', space=vmem, size = 0x1000, scoped, tag = 'scratch operand']
  %s0 = inlined_call_operand.hbm [shape: bf16[2,16,32], index: 0, kind: input, shape index: {}]
  %s1 = inlined_call_operand.hbm [shape: bf16[2,8,32], index: 1, kind: input, shape index: {}]
  %s2 = inlined_call_operand.hbm [shape: bf16[2,8,32], index: 2, kind: input, shape index: {}]
  %s3 = inlined_call_operand.hbm [shape: bf16[32,32], index: 3, kind: input, shape index: {}]
  %s4 = inlined_call_operand.hbm [shape: bf16[32,32], index: 4, kind: input, shape index: {}]
  %s5 = inlined_call_operand.vmem [shape: f32[1,32], index: 5, kind: input, shape index: {}]
  %s6 = inlined_call_operand.hbm [shape: f32[2,16,32], index: 6, kind: output, shape index: {}]
  %s7 = sld [smem:[#allocation0]]
  $region77: #{tpu_custom_call.1} parent=0
    _
  %s9 = ssub.s32 1, %s7
  %s10 = scalar_select 0, %s9, %s7
  $region1: #{tpu_custom_call.1} parent=0
    #allocation3 [shape = 'u8[8192]{0}', space=vmem, size = 0x2000, scoped, tag = 'input window, operand 0']
    #allocation4 [shape = 's32[2]{0}', space=sflag, size = 0x8, scoped, tag = 'scoped memory for tpu_custom_call.1']
    #allocation5 [shape = 's32[2]{0}', space=sflag, size = 0x8, scoped, tag = 'scoped memory for tpu_custom_call.1']
    #allocation6 [shape = 'u8[4096]{0}', space=vmem, size = 0x1000, scoped, tag = 'input window, operand 1']
    #allocation7 [shape = 's32[2]{0}', space=sflag, size = 0x8, scoped, tag = 'scoped memory for tpu_custom_call.1']
    #allocation8 [shape = 'u8[4096]{0}', space=vmem, size = 0x1000, scoped, tag = 'input window, operand 2']
    #allocation9 [shape = 'u8[8192]{0}', space=vmem, size = 0x2000, scoped, tag = 'input window, operand 3, single buffered']
    #allocation10 [shape = 's32[1]{0}', space=sflag, size = 0x4, scoped, tag = 'scoped memory for tpu_custom_call.1']
    #allocation11 [shape = 'u8[8192]{0}', space=vmem, size = 0x2000, scoped, tag = 'input window, operand 4, single buffered']
    #allocation12 [shape = 'u8[16384]{0}', space=vmem, size = 0x4000, scoped, tag = 'output window, operand 0']
    %11 = vsyncpa [#allocation4], 0
    %s12 = scalar_lea.sflag [#allocation4], 1
    %13 = vsyncpa %s12, 0
    %14 = vsyncpa [#allocation7], 0
    %s15 = scalar_lea.sflag [#allocation7], 1
    %16 = vsyncpa %s15, 0
    %17 = vsyncpa [#allocation10], 0
    %18 = vsyncpa [#allocation5], 0
    %s19 = scalar_lea.sflag [#allocation5], 1
    %20 = vsyncpa %s19, 0
    loop: start=0, step=1, limit=4
    $region2: #{tpu_custom_call.1} parent=1 // loop_pre_header
      _
    $region3: #{tpu_custom_call.1} parent=1 // loop_header
      %s22 = sphi 0, %s26
      %p23 = scmp.ge.s32.totalorder %s22, 4
      %s29 = sphi 0, %s41
      %s30 = sphi 0, %s37
      %s31 = sphi 0, %s29
      %s32 = sphi 0, %s30
      %s33 = sphi 0, %s31
      %s34 = sphi 0, %s32
      %s46 = sphi 0, %s48
      %s49 = sphi 0, %s46
      %s50 = sphi 0, %s49
      %s66 = sphi 0, %s50
      %s72 = sphi 0, %s74
      %s75 = sphi 0, %s72
      %s76 = sphi 0, %s75
      %s92 = sphi 0, %s76
      %s98 = sphi 0, %s100
      %s101 = sphi 0, %s98
      %s102 = sphi 0, %s101
      %s118 = sphi 0, %s102
      %s122 = sphi 0, %s122
      %s124 = sphi 0, %s122
      %s125 = sphi 0, %s124
      %s139 = sphi 0, %s125
      %s143 = sphi 0, %s143
      %s145 = sphi 0, %s143
      %s146 = sphi 0, %s145
      %s160 = sphi 0, %s146
      %s164 = sphi 0, %s164
      %s166 = sphi 0, %s164
      %s167 = sphi 0, %s166
      %s181 = sphi 0, %s167
      %s189 = sphi 0, %s191
      %s192 = sphi 0, %s189
      %s193 = sphi 0, %s192
      %s209 = sphi 0, %s193
    $region4: #{tpu_custom_call.1} parent=1 // loop_header_branch
      %25 = sbr.rel (%p23) target = $region8
    $region5: #{tpu_custom_call.1} parent=1 // loop_body
      %s27 = ssub.s32 %s22, 1
      %s28 = ssub.s32 %s22, 2
      %s35 = sadd.s32 1, %s30
      %p36 = scmp.ge.s32.totalorder %s35, 1
      %s37 = scalar_select %p36, 0, %s35
      %s38 = sadd.s32 1, %s29
      %s39 = scalar_select %p36, %s38, %s29
      %p40 = scmp.ge.s32.totalorder %s39, 2
      %s41 = scalar_select %p40, 0, %s39
      %s42 = ssub.s32 %s29, %s41
      %s43 = ssub.s32 %s30, %s37
      %s44 = sor.u32 %s42, %s43
      %p45 = scmp.eq.s32.totalorder %s44, 0
      %s47 = sadd.s32 %s46, 1
      %s48 = scalar_select %p45, %s46, %s47
      %p51 = pneg %p45
      %p52 = scmp.eq.s32.totalorder %s22, 1
      %p53 = por %p51, %p52
      %p54 = scmp.ne.s32.totalorder %s46, %s49
      %p55 = scmp.eq.s32.totalorder %s22, 0
      %p56 = por %p54, %p55
      %p57 = scmp.ne.s32.totalorder %s46, %s49
      %p58 = scmp.eq.s32.totalorder %s27, 1
      %p59 = por %p57, %p58
      %p60 = scmp.ne.s32.totalorder %s49, %s50
      %p61 = scmp.eq.s32.totalorder %s27, 0
      %p62 = por %p60, %p61
      %p63 = scmp.ne.s32.totalorder %s49, %s50
      %p64 = scmp.eq.s32.totalorder %s28, 1
      %p65 = por %p63, %p64
      %p67 = scmp.ne.s32.totalorder %s50, %s66
      %p68 = scmp.eq.s32.totalorder %s28, 0
      %p69 = por %p67, %p68
      %s70 = ssub.s32 %s29, %s41
      %p71 = scmp.eq.s32.totalorder %s70, 0
      %s73 = sadd.s32 %s72, 1
      %s74 = scalar_select %p71, %s72, %s73
      %p77 = pneg %p71
      %p78 = scmp.eq.s32.totalorder %s22, 1
      %p79 = por %p77, %p78
      %p80 = scmp.ne.s32.totalorder %s72, %s75
      %p81 = scmp.eq.s32.totalorder %s22, 0
      %p82 = por %p80, %p81
      %p83 = scmp.ne.s32.totalorder %s72, %s75
      %p84 = scmp.eq.s32.totalorder %s27, 1
      %p85 = por %p83, %p84
      %p86 = scmp.ne.s32.totalorder %s75, %s76
      %p87 = scmp.eq.s32.totalorder %s27, 0
      %p88 = por %p86, %p87
      %p89 = scmp.ne.s32.totalorder %s75, %s76
      %p90 = scmp.eq.s32.totalorder %s28, 1
      %p91 = por %p89, %p90
      %p93 = scmp.ne.s32.totalorder %s76, %s92
      %p94 = scmp.eq.s32.totalorder %s28, 0
      %p95 = por %p93, %p94
      %s96 = ssub.s32 %s29, %s41
      %p97 = scmp.eq.s32.totalorder %s96, 0
      %s99 = sadd.s32 %s98, 1
      %s100 = scalar_select %p97, %s98, %s99
      %p103 = pneg %p97
      %p104 = scmp.eq.s32.totalorder %s22, 1
      %p105 = por %p103, %p104
      %p106 = scmp.ne.s32.totalorder %s98, %s101
      %p107 = scmp.eq.s32.totalorder %s22, 0
      %p108 = por %p106, %p107
      %p109 = scmp.ne.s32.totalorder %s98, %s101
      %p110 = scmp.eq.s32.totalorder %s27, 1
      %p111 = por %p109, %p110
      %p112 = scmp.ne.s32.totalorder %s101, %s102
      %p113 = scmp.eq.s32.totalorder %s27, 0
      %p114 = por %p112, %p113
      %p115 = scmp.ne.s32.totalorder %s101, %s102
      %p116 = scmp.eq.s32.totalorder %s28, 1
      %p117 = por %p115, %p116
      %p119 = scmp.ne.s32.totalorder %s102, %s118
      %p120 = scmp.eq.s32.totalorder %s28, 0
      %p121 = por %p119, %p120
      %s123 = sadd.s32 %s122, 1
      %p126 = scmp.eq.s32.totalorder %s22, 1
      %p127 = scmp.ne.s32.totalorder %s122, %s124
      %p128 = scmp.eq.s32.totalorder %s22, 0
      %p129 = por %p127, %p128
      %p130 = scmp.ne.s32.totalorder %s122, %s124
      %p131 = scmp.eq.s32.totalorder %s27, 1
      %p132 = por %p130, %p131
      %p133 = scmp.ne.s32.totalorder %s124, %s125
      %p134 = scmp.eq.s32.totalorder %s27, 0
      %p135 = por %p133, %p134
      %p136 = scmp.ne.s32.totalorder %s124, %s125
      %p137 = scmp.eq.s32.totalorder %s28, 1
      %p138 = por %p136, %p137
      %p140 = scmp.ne.s32.totalorder %s125, %s139
      %p141 = scmp.eq.s32.totalorder %s28, 0
      %p142 = por %p140, %p141
      %s144 = sadd.s32 %s143, 1
      %p147 = scmp.eq.s32.totalorder %s22, 1
      %p148 = scmp.ne.s32.totalorder %s143, %s145
      %p149 = scmp.eq.s32.totalorder %s22, 0
      %p150 = por %p148, %p149
      %p151 = scmp.ne.s32.totalorder %s143, %s145
      %p152 = scmp.eq.s32.totalorder %s27, 1
      %p153 = por %p151, %p152
      %p154 = scmp.ne.s32.totalorder %s145, %s146
      %p155 = scmp.eq.s32.totalorder %s27, 0
      %p156 = por %p154, %p155
      %p157 = scmp.ne.s32.totalorder %s145, %s146
      %p158 = scmp.eq.s32.totalorder %s28, 1
      %p159 = por %p157, %p158
      %p161 = scmp.ne.s32.totalorder %s146, %s160
      %p162 = scmp.eq.s32.totalorder %s28, 0
      %p163 = por %p161, %p162
      %s165 = sadd.s32 %s164, 1
      %p168 = scmp.eq.s32.totalorder %s22, 1
      %p169 = scmp.ne.s32.totalorder %s164, %s166
      %p170 = scmp.eq.s32.totalorder %s22, 0
      %p171 = por %p169, %p170
      %p172 = scmp.ne.s32.totalorder %s164, %s166
      %p173 = scmp.eq.s32.totalorder %s27, 1
      %p174 = por %p172, %p173
      %p175 = scmp.ne.s32.totalorder %s166, %s167
      %p176 = scmp.eq.s32.totalorder %s27, 0
      %p177 = por %p175, %p176
      %p178 = scmp.ne.s32.totalorder %s166, %s167
      %p179 = scmp.eq.s32.totalorder %s28, 1
      %p180 = por %p178, %p179
      %p182 = scmp.ne.s32.totalorder %s167, %s181
      %p183 = scmp.eq.s32.totalorder %s28, 0
      %p184 = por %p182, %p183
      %s185 = ssub.s32 %s29, %s41
      %s186 = ssub.s32 %s30, %s37
      %s187 = sor.u32 %s185, %s186
      %p188 = scmp.eq.s32.totalorder %s187, 0
      %s190 = sadd.s32 %s189, 1
      %s191 = scalar_select %p188, %s189, %s190
      %p194 = pneg %p188
      %p195 = scmp.eq.s32.totalorder %s22, 1
      %p196 = por %p194, %p195
      %p197 = scmp.ne.s32.totalorder %s189, %s192
      %p198 = scmp.eq.s32.totalorder %s22, 0
      %p199 = por %p197, %p198
      %p200 = scmp.ne.s32.totalorder %s189, %s192
      %p201 = scmp.eq.s32.totalorder %s27, 1
      %p202 = por %p200, %p201
      %p203 = scmp.ne.s32.totalorder %s192, %s193
      %p204 = scmp.eq.s32.totalorder %s27, 0
      %p205 = por %p203, %p204
      %p206 = scmp.ne.s32.totalorder %s192, %s193
      %p207 = scmp.eq.s32.totalorder %s28, 1
      %p208 = por %p206, %p207
      %p210 = scmp.ne.s32.totalorder %s193, %s209
      %p211 = scmp.eq.s32.totalorder %s28, 0
      %p212 = por %p210, %p211
      %p213 = scmp.le.s32.totalorder 1, %s22
      %p214 = scmp.lt.s32.totalorder %s22, 3
      %p215 = pnand %p213, %p214
      %p216 = pneg %p215
      // Predicated region
      $region9: #{tpu_custom_call.1} parent=5 // pred_check
        _
      $region10: #{tpu_custom_call.1} parent=5 // pred_check_branch
        %218 = sbr.rel (%p215) target = $region12
      $region11: #{tpu_custom_call.1} parent=5 // pred_region
        %s219 = ssub.s32 %s22, 1
        // Predicated region
        $region13: #{tpu_custom_call.1} parent=11 // pred_check
          %p220 = pneg %p135
        $region14: #{tpu_custom_call.1} parent=11 // pred_check_branch
          %222 = sbr.rel (%p220) target = $region16
        $region15: #{tpu_custom_call.1} parent=11 // pred_region
          %s224 = ssub.s32 256, 256
          %225 = vsyncadd [#allocation10], %s224
          %s226 = sshll.u32 [#allocation9], 4
          %s227 = int_to_ptr.vmem [resolvable:$true] %s226
          %232 = dma.hbm_to_vmem [thread:$0]  %s3, 256, %s227, [#allocation10], 64, 64, 4
        $region16: #{tpu_custom_call.1} parent=11 // pred_fallthru
          _
        // Predicated region
        $region17: #{tpu_custom_call.1} parent=11 // pred_check
          %p233 = pneg %p156
        $region18: #{tpu_custom_call.1} parent=11 // pred_check_branch
          %235 = sbr.rel (%p233) target = $region20
        $region19: #{tpu_custom_call.1} parent=11 // pred_region
          %s237 = ssub.s32 256, 256
          %238 = vsyncadd [#allocation10], %s237
          %s239 = sshll.u32 [#allocation11], 4
          %s240 = int_to_ptr.vmem [resolvable:$true] %s239
          %245 = dma.hbm_to_vmem [thread:$0]  %s4, 256, %s240, [#allocation10], 64, 64, 4
        $region20: #{tpu_custom_call.1} parent=11 // pred_fallthru
          _
        // Predicated region
        $region21: #{tpu_custom_call.1} parent=11 // pred_check
          %p246 = pneg %p177
        $region22: #{tpu_custom_call.1} parent=11 // pred_check_branch
          %248 = sbr.rel (%p246) target = $region24
        $region23: #{tpu_custom_call.1} parent=11 // pred_region
          _
        $region24: #{tpu_custom_call.1} parent=11 // pred_fallthru
          _
      $region12: #{tpu_custom_call.1} parent=5 // pred_fallthru
        _
      %p249 = scmp.lt.s32.totalorder %s22, 2
      // Predicated region
      $region25: #{tpu_custom_call.1} parent=5 // pred_check
        %p250 = pneg %p249
      $region26: #{tpu_custom_call.1} parent=5 // pred_check_branch
        %252 = sbr.rel (%p250) target = $region28
      $region27: #{tpu_custom_call.1} parent=5 // pred_region
        // Predicated region
        $region29: #{tpu_custom_call.1} parent=27 // pred_check
          %p253 = pneg %p56
        $region30: #{tpu_custom_call.1} parent=27 // pred_check_branch
          %255 = sbr.rel (%p253) target = $region32
        $region31: #{tpu_custom_call.1} parent=27 // pred_region
          %s256 = sand.u32 %s46, 1
          %s257 = scalar_lea.sflag [#allocation4], %s256
          %s258 = sand.u32 %s46, 1
          %s259 = smul.addr %s258, 8
          %s260 = scalar_lea.vmem [#allocation3], %s259
          %s261 = smul.u32 2, %s30
          %s263 = ssub.s32 128, 128
          %264 = vsyncadd %s257, %s263
          %s265 = smul.addr %s29, 2
          %s266 = sadd.s32 %s261, %s265
          %s267 = smul.addr %s266, 64
          %s268 = scalar_lea.hbm %s0, %s267
          %s269 = sshll.u32 %s260, 4
          %s270 = int_to_ptr.vmem [resolvable:$true] %s269
          %275 = dma.hbm_to_vmem [thread:$0]  %s268, 128, %s270, %s257, 64, 64, 4
        $region32: #{tpu_custom_call.1} parent=27 // pred_fallthru
          _
        // Predicated region
        $region33: #{tpu_custom_call.1} parent=27 // pred_check
          %p276 = pneg %p82
        $region34: #{tpu_custom_call.1} parent=27 // pred_check_branch
          %278 = sbr.rel (%p276) target = $region36
        $region35: #{tpu_custom_call.1} parent=27 // pred_region
          %s279 = sand.u32 %s22, 1
          %s280 = scalar_lea.sflag [#allocation7], %s279
          %s281 = sand.u32 %s72, 1
          %s282 = smul.addr %s281, 4
          %s283 = scalar_lea.vmem [#allocation6], %s282
          %s285 = ssub.s32 64, 64
          %286 = vsyncadd %s280, %s285
          %s287 = smul.addr %s29, 64
          %s288 = scalar_lea.hbm %s1, %s287
          %s290 = sshll.u32 %s283, 4
          %s291 = int_to_ptr.vmem [resolvable:$true] %s290
          %293 = dma.hbm_to_vmem [thread:$0]  %s288, 64, %s291, %s280
        $region36: #{tpu_custom_call.1} parent=27 // pred_fallthru
          _
        // Predicated region
        $region37: #{tpu_custom_call.1} parent=27 // pred_check
          %p294 = pneg %p108
        $region38: #{tpu_custom_call.1} parent=27 // pred_check_branch
          %296 = sbr.rel (%p294) target = $region40
        $region39: #{tpu_custom_call.1} parent=27 // pred_region
          %s297 = sand.u32 %s22, 1
          %s298 = scalar_lea.sflag [#allocation7], %s297
          %s299 = sand.u32 %s98, 1
          %s300 = smul.addr %s299, 4
          %s301 = scalar_lea.vmem [#allocation8], %s300
          %s303 = ssub.s32 64, 64
          %304 = vsyncadd %s298, %s303
          %s305 = smul.addr %s29, 64
          %s306 = scalar_lea.hbm %s2, %s305
          %s308 = sshll.u32 %s301, 4
          %s309 = int_to_ptr.vmem [resolvable:$true] %s308
          %311 = dma.hbm_to_vmem [thread:$0]  %s306, 64, %s309, %s298
        $region40: #{tpu_custom_call.1} parent=27 // pred_fallthru
          _
      $region28: #{tpu_custom_call.1} parent=5 // pred_fallthru
        _
      %p312 = scmp.le.s32.totalorder 1, %s22
      %p313 = scmp.lt.s32.totalorder %s22, 3
      %p314 = pnand %p312, %p313
      %p315 = pneg %p314
      // Predicated region
      $region41: #{tpu_custom_call.1} parent=5 // pred_check
        _
      $region42: #{tpu_custom_call.1} parent=5 // pred_check_branch
        %317 = sbr.rel (%p314) target = $region44
      $region43: #{tpu_custom_call.1} parent=5 // pred_region
        %s318 = ssub.s32 %s22, 1
        %s319 = sand.u32 %s49, 1
        %s320 = scalar_lea.sflag [#allocation4], %s319
        %s321 = sand.u32 %s49, 1
        %s322 = smul.addr %s321, 8
        %s323 = scalar_lea.vmem [#allocation3], %s322
        // Predicated region
        $region45: #{tpu_custom_call.1} parent=43 // pred_check
          %p324 = pneg %p62
        $region46: #{tpu_custom_call.1} parent=43 // pred_check_branch
          %326 = sbr.rel (%p324) target = $region48
        $region47: #{tpu_custom_call.1} parent=43 // pred_region
          %327 = dma.done %s320, 128
        $region48: #{tpu_custom_call.1} parent=43 // pred_fallthru
          _
        %s328 = sand.u32 %s27, 1
        %s329 = scalar_lea.sflag [#allocation7], %s328
        %s330 = sand.u32 %s75, 1
        %s331 = smul.addr %s330, 4
        %s332 = scalar_lea.vmem [#allocation6], %s331
        // Predicated region
        $region49: #{tpu_custom_call.1} parent=43 // pred_check
          %p333 = pneg %p88
        $region50: #{tpu_custom_call.1} parent=43 // pred_check_branch
          %335 = sbr.rel (%p333) target = $region52
        $region51: #{tpu_custom_call.1} parent=43 // pred_region
          %336 = dma.done %s329, 64
        $region52: #{tpu_custom_call.1} parent=43 // pred_fallthru
          _
        %s337 = sand.u32 %s27, 1
        %s338 = scalar_lea.sflag [#allocation7], %s337
        %s339 = sand.u32 %s101, 1
        %s340 = smul.addr %s339, 4
        %s341 = scalar_lea.vmem [#allocation8], %s340
        // Predicated region
        $region53: #{tpu_custom_call.1} parent=43 // pred_check
          %p342 = pneg %p114
        $region54: #{tpu_custom_call.1} parent=43 // pred_check_branch
          %344 = sbr.rel (%p342) target = $region56
        $region55: #{tpu_custom_call.1} parent=43 // pred_region
          %345 = dma.done %s338, 64
        $region56: #{tpu_custom_call.1} parent=43 // pred_fallthru
          _
        // Predicated region
        $region57: #{tpu_custom_call.1} parent=43 // pred_check
          %p346 = pneg %p135
        $region58: #{tpu_custom_call.1} parent=43 // pred_check_branch
          %348 = sbr.rel (%p346) target = $region60
        $region59: #{tpu_custom_call.1} parent=43 // pred_region
          %349 = dma.done [#allocation10], 256
        $region60: #{tpu_custom_call.1} parent=43 // pred_fallthru
          _
        // Predicated region
        $region61: #{tpu_custom_call.1} parent=43 // pred_check
          %p350 = pneg %p156
        $region62: #{tpu_custom_call.1} parent=43 // pred_check_branch
          %352 = sbr.rel (%p350) target = $region64
        $region63: #{tpu_custom_call.1} parent=43 // pred_region
          %353 = dma.done [#allocation10], 256
        $region64: #{tpu_custom_call.1} parent=43 // pred_fallthru
          _
        %s354 = sand.u32 %s49, 1
        %s355 = scalar_lea.sflag [#allocation4], %s354
        %s356 = sand.u32 %s49, 1
        %s357 = smul.addr %s356, 8
        %s358 = scalar_lea.vmem [#allocation3], %s357
        %p359 = pneg %p62
        %p360 = pneg %p59
        %s361 = sand.u32 %s27, 1
        %s362 = scalar_lea.sflag [#allocation7], %s361
        %s363 = sand.u32 %s75, 1
        %s364 = smul.addr %s363, 4
        %s365 = scalar_lea.vmem [#allocation6], %s364
        %p366 = pneg %p88
        %p367 = pneg %p85
        %s368 = sand.u32 %s27, 1
        %s369 = scalar_lea.sflag [#allocation7], %s368
        %s370 = sand.u32 %s101, 1
        %s371 = smul.addr %s370, 4
        %s372 = scalar_lea.vmem [#allocation8], %s371
        %p373 = pneg %p114
        %p374 = pneg %p111
        %p375 = pneg %p135
        %p376 = pneg %p132
        %p377 = pneg %p156
        %p378 = pneg %p153
        %p379 = pneg %p177
        %p380 = pneg %p174
        %p381 = pneg %p205
        %p382 = pneg %p202
        %s383 = sand.u32 %s192, 1
        %s384 = scalar_lea.sflag [#allocation5], %s383
        %s385 = sand.u32 %s192, 1
        %s386 = smul.addr %s385, 16
        %s387 = scalar_lea.vmem [#allocation12], %s386
        %s388 = smul.u32 2, %s32
        %s389 = smul.u32 2, %s32
        %v391 = vld [vmem:[%s323] sm:$0xf]
        %v392 = vld [vmem:[%s323 + $0x4] sm:$0xf]
        %v393 = vld [vmem:[%s332] sm:$0xf]
        %v394 = vld [vmem:[%s341] sm:$0xf]
        %v395 = vld [vmem:[#allocation9] sm:$0xf]
        %v396 = vld [vmem:[#allocation9 + $0x4] sm:$0xf]
        %v397 = vld [vmem:[#allocation9 + $0x8] sm:$0xf]
        %v398 = vld [vmem:[#allocation9 + $0xc] sm:$0xf]
        %v401 = vunpack.c.l.b16 %v391
        %v402 = vunpack.c.l.b16 %v392
        %v403 = vpack.c.b16 %v402, %v401
        %v408 = vunpack.c.l.b16 %v395
        %v409 = vunpack.c.l.b16 %v396
        %v410 = vunpack.c.l.b16 %v397
        %v411 = vunpack.c.l.b16 %v398
        %v412 = vpack.c.b16 %v409, %v408
        %v413 = vpack.c.b16 %v411, %v410
        %vm416 = vcmask 261120
        %v418 = vsel %vm416, %v403, 0
        %420 = vmatprep.subr.bf16.mxu0 0
        %421 = vmatpush1.bf16.msra.mxu0 0
        %422 = vmatprep.subr.bf16.mxu0 0
        %423 = vmatpush1.bf16.msra.mxu0 0
        %424 = vmatprep.subr.bf16.mxu0 0
        %425 = vmatpush1.bf16.msra.mxu0 0
        %426 = vmatprep.subr.bf16.mxu0 0
        %427 = vmatpush1.bf16.msra.mxu0 0
        %428 = vmatprep.subr.bf16.mxu0 0
        %429 = vmatpush1.bf16.msra.mxu0 0
        %430 = vmatprep.subr.bf16.mxu0 0
        %431 = vmatpush1.bf16.msra.mxu0 0
        %432 = vmatprep.subr.bf16.mxu0 0
        %433 = vmatpush1.bf16.msra.mxu0 %v413
        %434 = vmatprep.subr.bf16.mxu0 0
        %435 = vmatpush1.bf16.msra.mxu0 %v412
        %436 = vmatprep.subr.bf16.mxu0 0
        %437 = vmatpush2.bf16.msra.mxu0 0
        %438 = vmatprep.subr.bf16.mxu0 0
        %439 = vmatpush2.bf16.msra.mxu0 0
        %440 = vmatprep.subr.bf16.mxu0 0
        %441 = vmatpush2.bf16.msra.mxu0 0
        %442 = vmatprep.subr.bf16.mxu0 0
        %443 = vmatpush2.bf16.msra.mxu0 0
        %444 = vmatprep.subr.bf16.mxu0 0
        %445 = vmatpush2.bf16.msra.mxu0 0
        %446 = vmatprep.subr.bf16.mxu0 0
        %447 = vmatpush2.bf16.msra.mxu0 0
        %448 = vmatprep.subr.bf16.mxu0 0
        %449 = vmatpush2.bf16.msra.mxu0 0
        %450 = vmatprep.subr.bf16.mxu0 0
        %451 = vmatpush2.bf16.msra.mxu0 0
        %452 = vmatprep.mubr.bf16.mxu0 0
        %453 = vmatmul.mubr.bf16.gmra.mxu0 %v418
        %v454 = vpop.f32.mrf.mxu0
        %v455 = vadd.f32 0.0, %v454
        %v456 = vpop.f32.mrf.mxu0
        %v457 = vpop.f32.mrf.mxu0
        %v458 = vadd.f32 0.0, %v457
        %v459 = vpop.f32.mrf.mxu0
        %460 = vdwg.mxu0
        %v461 = vpack.c.bf16 %v458, %v455
        %vm462 = vcmask 64512
        %v464 = vsel %vm462, %v461, 0
        %v467 = vsel %vm462, %v393, 0
        %469 = vmatprep.subr.bf16.mxu0 0
        %470 = vmatpush1.bf16.xpose.msra.mxu0 0
        %471 = vmatprep.subr.bf16.mxu0 0
        %472 = vmatpush1.bf16.xpose.msra.mxu0 0
        %473 = vmatprep.subr.bf16.mxu0 0
        %474 = vmatpush1.bf16.xpose.msra.mxu0 0
        %475 = vmatprep.subr.bf16.mxu0 0
        %476 = vmatpush1.bf16.xpose.msra.mxu0 0
        %477 = vmatprep.subr.bf16.mxu0 0
        %478 = vmatpush1.bf16.xpose.msra.mxu0 0
        %479 = vmatprep.subr.bf16.mxu0 0
        %480 = vmatpush1.bf16.xpose.msra.mxu0 0
        %481 = vmatprep.subr.bf16.mxu0 0
        %482 = vmatpush1.bf16.xpose.msra.mxu0 0
        %483 = vmatprep.subr.bf16.mxu0 0
        %484 = vmatpush1.bf16.xpose.msra.mxu0 %v467
        %485 = vmatprep.subr.bf16.mxu0 0
        %486 = vmatpush2.bf16.xpose.msra.mxu0 0
        %487 = vmatprep.subr.bf16.mxu0 0
        %488 = vmatpush2.bf16.xpose.msra.mxu0 0
        %489 = vmatprep.subr.bf16.mxu0 0
        %490 = vmatpush2.bf16.xpose.msra.mxu0 0
        %491 = vmatprep.subr.bf16.mxu0 0
        %492 = vmatpush2.bf16.xpose.msra.mxu0 0
        %493 = vmatprep.subr.bf16.mxu0 0
        %494 = vmatpush2.bf16.xpose.msra.mxu0 0
        %495 = vmatprep.subr.bf16.mxu0 0
        %496 = vmatpush2.bf16.xpose.msra.mxu0 0
        %497 = vmatprep.subr.bf16.mxu0 0
        %498 = vmatpush2.bf16.xpose.msra.mxu0 0
        %499 = vmatprep.subr.bf16.mxu0 0
        %500 = vmatpush2.bf16.xpose.msra.mxu0 0
        %501 = vmatprep.mubr.bf16.mxu0 0
        %502 = vmatmul.mubr.bf16.gmra.mxu0 %v464
        %v503 = vpop.f32.mrf.mxu0
        %v504 = vadd.f32 0.0, %v503
        %v505 = vpop.f32.mrf.mxu0
        %v506 = vpop.f32.mrf.mxu0
        %v507 = vadd.f32 0.0, %v506
        %v508 = vpop.f32.mrf.mxu0
        %509 = vdwg.mxu0
        %v510 = vsel %vm462, %v504, -inf
        %511 = vmax.xlane.f32.xlu0 %v510
        %v512 = vpop.xlane.xlu0 %511
        %v513 = vsel %vm462, %v507, -inf
        %514 = vmax.xlane.f32.xlu0 %v513
        %v515 = vpop.xlane.xlu0 %514
        %v516 = vsub.f32 %v504, %v512
        %v517 = vsub.f32 %v507, %v515
        %v518 = vmul.f32 %v516, 1.442695
        %v519 = vpow.pop %v518
        %v520 = vmul.f32 %v517, 1.442695
        %v521 = vpow.pop %v520
        %v522 = vsel %vm462, %v519, 0.0
        %523 = vadd.xlane.f32.xlu0 %v522
        %v524 = vpop.xlane.xlu0 %523
        %v525 = vsel %vm462, %v521, 0.0
        %526 = vadd.xlane.f32.xlu0 %v525
        %v527 = vpop.xlane.xlu0 %526
        %v528 = vpack.c.bf16 %v521, %v519
        %v530 = vsel %vm462, %v528, 0
        %vm532 = vcmask 1043456
        %v534 = vsel %vm532, %v394, 0
        %536 = vmatprep.subr.bf16.mxu0 0
        %537 = vmatpush1.bf16.msra.mxu0 0
        %538 = vmatprep.subr.bf16.mxu0 0
        %539 = vmatpush1.bf16.msra.mxu0 0
        %540 = vmatprep.subr.bf16.mxu0 0
        %541 = vmatpush1.bf16.msra.mxu0 0
        %542 = vmatprep.subr.bf16.mxu0 0
        %543 = vmatpush1.bf16.msra.mxu0 0
        %544 = vmatprep.subr.bf16.mxu0 0
        %545 = vmatpush1.bf16.msra.mxu0 0
        %546 = vmatprep.subr.bf16.mxu0 0
        %547 = vmatpush1.bf16.msra.mxu0 0
        %548 = vmatprep.subr.bf16.mxu0 0
        %549 = vmatpush1.bf16.msra.mxu0 0
        %550 = vmatprep.subr.bf16.mxu0 0
        %551 = vmatpush1.bf16.msra.mxu0 %v534
        %552 = vmatprep.subr.bf16.mxu0 0
        %553 = vmatpush2.bf16.msra.mxu0 0
        %554 = vmatprep.subr.bf16.mxu0 0
        %555 = vmatpush2.bf16.msra.mxu0 0
        %556 = vmatprep.subr.bf16.mxu0 0
        %557 = vmatpush2.bf16.msra.mxu0 0
        %558 = vmatprep.subr.bf16.mxu0 0
        %559 = vmatpush2.bf16.msra.mxu0 0
        %560 = vmatprep.subr.bf16.mxu0 0
        %561 = vmatpush2.bf16.msra.mxu0 0
        %562 = vmatprep.subr.bf16.mxu0 0
        %563 = vmatpush2.bf16.msra.mxu0 0
        %564 = vmatprep.subr.bf16.mxu0 0
        %565 = vmatpush2.bf16.msra.mxu0 0
        %566 = vmatprep.subr.bf16.mxu0 0
        %567 = vmatpush2.bf16.msra.mxu0 0
        %568 = vmatprep.mubr.bf16.mxu0 0
        %569 = vmatmul.mubr.bf16.gmra.mxu0 %v530
        %v570 = vpop.f32.mrf.mxu0
        %v571 = vadd.f32 0.0, %v570
        %v572 = vpop.f32.mrf.mxu0
        %v573 = vpop.f32.mrf.mxu0
        %v574 = vadd.f32 0.0, %v573
        %v575 = vpop.f32.mrf.mxu0
        %576 = vdwg.mxu0
        %v577 = vrcp.pop %v524
        %v578 = vrcp.pop %v527
        %v579 = vmul.f32 %v571, %v577
        %v580 = vmul.f32 %v574, %v578
        %v581 = vpack.c.bf16 %v580, %v579
        %v583 = vunpack.c.l.b16 %v581
        %v584 = vunpack.c.h.b16 %v581
        %v585 = vpack.c.b16 %v583, %v583
        %v586 = vpack.c.b16 %v584, %v584
        %vm589 = vcmask 60416
        %590 = vst.msk [vmem:[#allocation2] sm:$0xf] %vm589, %v585
        %591 = vst.msk [vmem:[#allocation2 + $0x4] sm:$0xf] %vm589, %v586
        %593 = vrot.lane.b32.xlu0 %v461, 120
        %v594 = vpop.permute.xlu0 %593
        %v596 = vunpack.c.l.b16 %v393
        %v597 = vpack.c.b16 %v596, %v596
        %598 = vrot.lane.b32.xlu0 %v597, 120
        %v599 = vpop.permute.xlu0 %598
        %v601 = vsel %vm462, %v594, 0
        %v604 = vsel %vm462, %v599, 0
        %606 = vmatprep.subr.bf16.mxu0 0
        %607 = vmatpush1.bf16.xpose.msra.mxu0 0
        %608 = vmatprep.subr.bf16.mxu0 0
        %609 = vmatpush1.bf16.xpose.msra.mxu0 0
        %610 = vmatprep.subr.bf16.mxu0 0
        %611 = vmatpush1.bf16.xpose.msra.mxu0 0
        %612 = vmatprep.subr.bf16.mxu0 0
        %613 = vmatpush1.bf16.xpose.msra.mxu0 0
        %614 = vmatprep.subr.bf16.mxu0 0
        %615 = vmatpush1.bf16.xpose.msra.mxu0 0
        %616 = vmatprep.subr.bf16.mxu0 0
        %617 = vmatpush1.bf16.xpose.msra.mxu0 0
        %618 = vmatprep.subr.bf16.mxu0 0
        %619 = vmatpush1.bf16.xpose.msra.mxu0 0
        %620 = vmatprep.subr.bf16.mxu0 0
        %621 = vmatpush1.bf16.xpose.msra.mxu0 %v604
        %622 = vmatprep.subr.bf16.mxu0 0
        %623 = vmatpush2.bf16.xpose.msra.mxu0 0
        %624 = vmatprep.subr.bf16.mxu0 0
        %625 = vmatpush2.bf16.xpose.msra.mxu0 0
        %626 = vmatprep.subr.bf16.mxu0 0
        %627 = vmatpush2.bf16.xpose.msra.mxu0 0
        %628 = vmatprep.subr.bf16.mxu0 0
        %629 = vmatpush2.bf16.xpose.msra.mxu0 0
        %630 = vmatprep.subr.bf16.mxu0 0
        %631 = vmatpush2.bf16.xpose.msra.mxu0 0
        %632 = vmatprep.subr.bf16.mxu0 0
        %633 = vmatpush2.bf16.xpose.msra.mxu0 0
        %634 = vmatprep.subr.bf16.mxu0 0
        %635 = vmatpush2.bf16.xpose.msra.mxu0 0
        %636 = vmatprep.subr.bf16.mxu0 0
        %637 = vmatpush2.bf16.xpose.msra.mxu0 0
        %638 = vmatprep.mubr.bf16.mxu0 0
        %639 = vmatmul.mubr.bf16.gmra.mxu0 %v601
        %v640 = vpop.f32.mrf.mxu0
        %v641 = vadd.f32 0.0, %v640
        %v642 = vpop.f32.mrf.mxu0
        %v643 = vpop.f32.mrf.mxu0
        %v644 = vadd.f32 0.0, %v643
        %v645 = vpop.f32.mrf.mxu0
        %646 = vdwg.mxu0
        %v647 = vsel %vm462, %v641, -inf
        %648 = vmax.xlane.f32.xlu0 %v647
        %v649 = vpop.xlane.xlu0 %648
        %v650 = vsel %vm462, %v644, -inf
        %651 = vmax.xlane.f32.xlu0 %v650
        %v652 = vpop.xlane.xlu0 %651
        %v653 = vsub.f32 %v641, %v649
        %v654 = vsub.f32 %v644, %v652
        %v655 = vmul.f32 %v653, 1.442695
        %v656 = vpow.pop %v655
        %v657 = vmul.f32 %v654, 1.442695
        %v658 = vpow.pop %v657
        %v659 = vsel %vm462, %v656, 0.0
        %660 = vadd.xlane.f32.xlu0 %v659
        %v661 = vpop.xlane.xlu0 %660
        %v662 = vsel %vm462, %v658, 0.0
        %663 = vadd.xlane.f32.xlu0 %v662
        %v664 = vpop.xlane.xlu0 %663
        %v665 = vpack.c.bf16 %v658, %v656
        %v667 = vunpack.c.l.b16 %v394
        %v668 = vpack.c.b16 %v667, %v667
        %669 = vrot.lane.b32.xlu0 %v668, 120
        %v670 = vpop.permute.xlu0 %669
        %v672 = vsel %vm462, %v665, 0
        %v675 = vsel %vm532, %v670, 0
        %677 = vmatprep.subr.bf16.mxu0 0
        %678 = vmatpush1.bf16.msra.mxu0 0
        %679 = vmatprep.subr.bf16.mxu0 0
        %680 = vmatpush1.bf16.msra.mxu0 0
        %681 = vmatprep.subr.bf16.mxu0 0
        %682 = vmatpush1.bf16.msra.mxu0 0
        %683 = vmatprep.subr.bf16.mxu0 0
        %684 = vmatpush1.bf16.msra.mxu0 0
        %685 = vmatprep.subr.bf16.mxu0 0
        %686 = vmatpush1.bf16.msra.mxu0 0
        %687 = vmatprep.subr.bf16.mxu0 0
        %688 = vmatpush1.bf16.msra.mxu0 0
        %689 = vmatprep.subr.bf16.mxu0 0
        %690 = vmatpush1.bf16.msra.mxu0 0
        %691 = vmatprep.subr.bf16.mxu0 0
        %692 = vmatpush1.bf16.msra.mxu0 %v675
        %693 = vmatprep.subr.bf16.mxu0 0
        %694 = vmatpush2.bf16.msra.mxu0 0
        %695 = vmatprep.subr.bf16.mxu0 0
        %696 = vmatpush2.bf16.msra.mxu0 0
        %697 = vmatprep.subr.bf16.mxu0 0
        %698 = vmatpush2.bf16.msra.mxu0 0
        %699 = vmatprep.subr.bf16.mxu0 0
        %700 = vmatpush2.bf16.msra.mxu0 0
        %701 = vmatprep.subr.bf16.mxu0 0
        %702 = vmatpush2.bf16.msra.mxu0 0
        %703 = vmatprep.subr.bf16.mxu0 0
        %704 = vmatpush2.bf16.msra.mxu0 0
        %705 = vmatprep.subr.bf16.mxu0 0
        %706 = vmatpush2.bf16.msra.mxu0 0
        %707 = vmatprep.subr.bf16.mxu0 0
        %708 = vmatpush2.bf16.msra.mxu0 0
        %709 = vmatprep.mubr.bf16.mxu0 0
        %710 = vmatmul.mubr.bf16.gmra.mxu0 %v672
        %v711 = vpop.f32.mrf.mxu0
        %v712 = vadd.f32 0.0, %v711
        %v713 = vpop.f32.mrf.mxu0
        %v714 = vpop.f32.mrf.mxu0
        %v715 = vadd.f32 0.0, %v714
        %v716 = vpop.f32.mrf.mxu0
        %717 = vdwg.mxu0
        %v718 = vrcp.pop %v661
        %v719 = vrcp.pop %v664
        %v720 = vmul.f32 %v712, %v718
        %v721 = vmul.f32 %v715, %v719
        %v722 = vpack.c.bf16 %v721, %v720
        %v724 = vunpack.c.l.b16 %v722
        %v725 = vunpack.c.h.b16 %v722
        %v726 = vpack.c.b16 %v724, %v724
        %v727 = vpack.c.b16 %v725, %v725
        %728 = vrot.lane.b32.xlu0 %v726, 8
        %v729 = vpop.permute.xlu0 %728
        %730 = vrot.lane.b32.xlu0 %v727, 8
        %v731 = vpop.permute.xlu0 %730
        %vm734 = vcmask 126016
        %735 = vst.msk [vmem:[#allocation2] sm:$0xf] %vm734, %v729
        %736 = vst.msk [vmem:[#allocation2 + $0x4] sm:$0xf] %vm734, %v731
        %737 = vrot.lane.b32.xlu0 %v461, 112
        %v738 = vpop.permute.xlu0 %737
        %739 = vrot.lane.b32.xlu0 %v597, 112
        %v740 = vpop.permute.xlu0 %739
        %v742 = vsel %vm462, %v738, 0
        %v745 = vsel %vm462, %v740, 0
        %747 = vmatprep.subr.bf16.mxu0 0
        %748 = vmatpush1.bf16.xpose.msra.mxu0 0
        %749 = vmatprep.subr.bf16.mxu0 0
        %750 = vmatpush1.bf16.xpose.msra.mxu0 0
        %751 = vmatprep.subr.bf16.mxu0 0
        %752 = vmatpush1.bf16.xpose.msra.mxu0 0
        %753 = vmatprep.subr.bf16.mxu0 0
        %754 = vmatpush1.bf16.xpose.msra.mxu0 0
        %755 = vmatprep.subr.bf16.mxu0 0
        %756 = vmatpush1.bf16.xpose.msra.mxu0 0
        %757 = vmatprep.subr.bf16.mxu0 0
        %758 = vmatpush1.bf16.xpose.msra.mxu0 0
        %759 = vmatprep.subr.bf16.mxu0 0
        %760 = vmatpush1.bf16.xpose.msra.mxu0 0
        %761 = vmatprep.subr.bf16.mxu0 0
        %762 = vmatpush1.bf16.xpose.msra.mxu0 %v745
        %763 = vmatprep.subr.bf16.mxu0 0
        %764 = vmatpush2.bf16.xpose.msra.mxu0 0
        %765 = vmatprep.subr.bf16.mxu0 0
        %766 = vmatpush2.bf16.xpose.msra.mxu0 0
        %767 = vmatprep.subr.bf16.mxu0 0
        %768 = vmatpush2.bf16.xpose.msra.mxu0 0
        %769 = vmatprep.subr.bf16.mxu0 0
        %770 = vmatpush2.bf16.xpose.msra.mxu0 0
        %771 = vmatprep.subr.bf16.mxu0 0
        %772 = vmatpush2.bf16.xpose.msra.mxu0 0
        %773 = vmatprep.subr.bf16.mxu0 0
        %774 = vmatpush2.bf16.xpose.msra.mxu0 0
        %775 = vmatprep.subr.bf16.mxu0 0
        %776 = vmatpush2.bf16.xpose.msra.mxu0 0
        %777 = vmatprep.subr.bf16.mxu0 0
        %778 = vmatpush2.bf16.xpose.msra.mxu0 0
        %779 = vmatprep.mubr.bf16.mxu0 0
        %780 = vmatmul.mubr.bf16.gmra.mxu0 %v742
        %v781 = vpop.f32.mrf.mxu0
        %v782 = vadd.f32 0.0, %v781
        %v783 = vpop.f32.mrf.mxu0
        %v784 = vpop.f32.mrf.mxu0
        %v785 = vadd.f32 0.0, %v784
        %v786 = vpop.f32.mrf.mxu0
        %787 = vdwg.mxu0
        %v788 = vsel %vm462, %v782, -inf
        %789 = vmax.xlane.f32.xlu0 %v788
        %v790 = vpop.xlane.xlu0 %789
        %v791 = vsel %vm462, %v785, -inf
        %792 = vmax.xlane.f32.xlu0 %v791
        %v793 = vpop.xlane.xlu0 %792
        %v794 = vsub.f32 %v782, %v790
        %v795 = vsub.f32 %v785, %v793
        %v796 = vmul.f32 %v794, 1.442695
        %v797 = vpow.pop %v796
        %v798 = vmul.f32 %v795, 1.442695
        %v799 = vpow.pop %v798
        %v800 = vsel %vm462, %v797, 0.0
        %801 = vadd.xlane.f32.xlu0 %v800
        %v802 = vpop.xlane.xlu0 %801
        %v803 = vsel %vm462, %v799, 0.0
        %804 = vadd.xlane.f32.xlu0 %v803
        %v805 = vpop.xlane.xlu0 %804
        %v806 = vpack.c.bf16 %v799, %v797
        %807 = vrot.lane.b32.xlu0 %v668, 112
        %v808 = vpop.permute.xlu0 %807
        %v810 = vsel %vm462, %v806, 0
        %v813 = vsel %vm532, %v808, 0
        %815 = vmatprep.subr.bf16.mxu0 0
        %816 = vmatpush1.bf16.msra.mxu0 0
        %817 = vmatprep.subr.bf16.mxu0 0
        %818 = vmatpush1.bf16.msra.mxu0 0
        %819 = vmatprep.subr.bf16.mxu0 0
        %820 = vmatpush1.bf16.msra.mxu0 0
        %821 = vmatprep.subr.bf16.mxu0 0
        %822 = vmatpush1.bf16.msra.mxu0 0
        %823 = vmatprep.subr.bf16.mxu0 0
        %824 = vmatpush1.bf16.msra.mxu0 0
        %825 = vmatprep.subr.bf16.mxu0 0
        %826 = vmatpush1.bf16.msra.mxu0 0
        %827 = vmatprep.subr.bf16.mxu0 0
        %828 = vmatpush1.bf16.msra.mxu0 0
        %829 = vmatprep.subr.bf16.mxu0 0
        %830 = vmatpush1.bf16.msra.mxu0 %v813
        %831 = vmatprep.subr.bf16.mxu0 0
        %832 = vmatpush2.bf16.msra.mxu0 0
        %833 = vmatprep.subr.bf16.mxu0 0
        %834 = vmatpush2.bf16.msra.mxu0 0
        %835 = vmatprep.subr.bf16.mxu0 0
        %836 = vmatpush2.bf16.msra.mxu0 0
        %837 = vmatprep.subr.bf16.mxu0 0
        %838 = vmatpush2.bf16.msra.mxu0 0
        %839 = vmatprep.subr.bf16.mxu0 0
        %840 = vmatpush2.bf16.msra.mxu0 0
        %841 = vmatprep.subr.bf16.mxu0 0
        %842 = vmatpush2.bf16.msra.mxu0 0
        %843 = vmatprep.subr.bf16.mxu0 0
        %844 = vmatpush2.bf16.msra.mxu0 0
        %845 = vmatprep.subr.bf16.mxu0 0
        %846 = vmatpush2.bf16.msra.mxu0 0
        %847 = vmatprep.mubr.bf16.mxu0 0
        %848 = vmatmul.mubr.bf16.gmra.mxu0 %v810
        %v849 = vpop.f32.mrf.mxu0
        %v850 = vadd.f32 0.0, %v849
        %v851 = vpop.f32.mrf.mxu0
        %v852 = vpop.f32.mrf.mxu0
        %v853 = vadd.f32 0.0, %v852
        %v854 = vpop.f32.mrf.mxu0
        %855 = vdwg.mxu0
        %v856 = vrcp.pop %v802
        %v857 = vrcp.pop %v805
        %v858 = vmul.f32 %v850, %v856
        %v859 = vmul.f32 %v853, %v857
        %v860 = vpack.c.bf16 %v859, %v858
        %v862 = vunpack.c.l.b16 %v860
        %v863 = vunpack.c.h.b16 %v860
        %v864 = vpack.c.b16 %v862, %v862
        %v865 = vpack.c.b16 %v863, %v863
        %866 = vrot.lane.b32.xlu0 %v864, 16
        %v867 = vpop.permute.xlu0 %866
        %868 = vrot.lane.b32.xlu0 %v865, 16
        %v869 = vpop.permute.xlu0 %868
        %vm872 = vcmask 191616
        %873 = vst.msk [vmem:[#allocation2] sm:$0xf] %vm872, %v867
        %874 = vst.msk [vmem:[#allocation2 + $0x4] sm:$0xf] %vm872, %v869
        %875 = vrot.lane.b32.xlu0 %v461, 104
        %v876 = vpop.permute.xlu0 %875
        %877 = vrot.lane.b32.xlu0 %v597, 104
        %v878 = vpop.permute.xlu0 %877
        %v880 = vsel %vm462, %v876, 0
        %v883 = vsel %vm462, %v878, 0
        %885 = vmatprep.subr.bf16.mxu0 0
        %886 = vmatpush1.bf16.xpose.msra.mxu0 0
        %887 = vmatprep.subr.bf16.mxu0 0
        %888 = vmatpush1.bf16.xpose.msra.mxu0 0
        %889 = vmatprep.subr.bf16.mxu0 0
        %890 = vmatpush1.bf16.xpose.msra.mxu0 0
        %891 = vmatprep.subr.bf16.mxu0 0
        %892 = vmatpush1.bf16.xpose.msra.mxu0 0
        %893 = vmatprep.subr.bf16.mxu0 0
        %894 = vmatpush1.bf16.xpose.msra.mxu0 0
        %895 = vmatprep.subr.bf16.mxu0 0
        %896 = vmatpush1.bf16.xpose.msra.mxu0 0
        %897 = vmatprep.subr.bf16.mxu0 0
        %898 = vmatpush1.bf16.xpose.msra.mxu0 0
        %899 = vmatprep.subr.bf16.mxu0 0
        %900 = vmatpush1.bf16.xpose.msra.mxu0 %v883
        %901 = vmatprep.subr.bf16.mxu0 0
        %902 = vmatpush2.bf16.xpose.msra.mxu0 0
        %903 = vmatprep.subr.bf16.mxu0 0
        %904 = vmatpush2.bf16.xpose.msra.mxu0 0
        %905 = vmatprep.subr.bf16.mxu0 0
        %906 = vmatpush2.bf16.xpose.msra.mxu0 0
        %907 = vmatprep.subr.bf16.mxu0 0
        %908 = vmatpush2.bf16.xpose.msra.mxu0 0
        %909 = vmatprep.subr.bf16.mxu0 0
        %910 = vmatpush2.bf16.xpose.msra.mxu0 0
        %911 = vmatprep.subr.bf16.mxu0 0
        %912 = vmatpush2.bf16.xpose.msra.mxu0 0
        %913 = vmatprep.subr.bf16.mxu0 0
        %914 = vmatpush2.bf16.xpose.msra.mxu0 0
        %915 = vmatprep.subr.bf16.mxu0 0
        %916 = vmatpush2.bf16.xpose.msra.mxu0 0
        %917 = vmatprep.mubr.bf16.mxu0 0
        %918 = vmatmul.mubr.bf16.gmra.mxu0 %v880
        %v919 = vpop.f32.mrf.mxu0
        %v920 = vadd.f32 0.0, %v919
        %v921 = vpop.f32.mrf.mxu0
        %v922 = vpop.f32.mrf.mxu0
        %v923 = vadd.f32 0.0, %v922
        %v924 = vpop.f32.mrf.mxu0
        %925 = vdwg.mxu0
        %v926 = vsel %vm462, %v920, -inf
        %927 = vmax.xlane.f32.xlu0 %v926
        %v928 = vpop.xlane.xlu0 %927
        %v929 = vsel %vm462, %v923, -inf
        %930 = vmax.xlane.f32.xlu0 %v929
        %v931 = vpop.xlane.xlu0 %930
        %v932 = vsub.f32 %v920, %v928
        %v933 = vsub.f32 %v923, %v931
        %v934 = vmul.f32 %v932, 1.442695
        %v935 = vpow.pop %v934
        %v936 = vmul.f32 %v933, 1.442695
        %v937 = vpow.pop %v936
        %v938 = vsel %vm462, %v935, 0.0
        %939 = vadd.xlane.f32.xlu0 %v938
        %v940 = vpop.xlane.xlu0 %939
        %v941 = vsel %vm462, %v937, 0.0
        %942 = vadd.xlane.f32.xlu0 %v941
        %v943 = vpop.xlane.xlu0 %942
        %v944 = vpack.c.bf16 %v937, %v935
        %945 = vrot.lane.b32.xlu0 %v668, 104
        %v946 = vpop.permute.xlu0 %945
        %v948 = vsel %vm462, %v944, 0
        %v951 = vsel %vm532, %v946, 0
        %953 = vmatprep.subr.bf16.mxu0 0
        %954 = vmatpush1.bf16.msra.mxu0 0
        %955 = vmatprep.subr.bf16.mxu0 0
        %956 = vmatpush1.bf16.msra.mxu0 0
        %957 = vmatprep.subr.bf16.mxu0 0
        %958 = vmatpush1.bf16.msra.mxu0 0
        %959 = vmatprep.subr.bf16.mxu0 0
        %960 = vmatpush1.bf16.msra.mxu0 0
        %961 = vmatprep.subr.bf16.mxu0 0
        %962 = vmatpush1.bf16.msra.mxu0 0
        %963 = vmatprep.subr.bf16.mxu0 0
        %964 = vmatpush1.bf16.msra.mxu0 0
        %965 = vmatprep.subr.bf16.mxu0 0
        %966 = vmatpush1.bf16.msra.mxu0 0
        %967 = vmatprep.subr.bf16.mxu0 0
        %968 = vmatpush1.bf16.msra.mxu0 %v951
        %969 = vmatprep.subr.bf16.mxu0 0
        %970 = vmatpush2.bf16.msra.mxu0 0
        %971 = vmatprep.subr.bf16.mxu0 0
        %972 = vmatpush2.bf16.msra.mxu0 0
        %973 = vmatprep.subr.bf16.mxu0 0
        %974 = vmatpush2.bf16.msra.mxu0 0
        %975 = vmatprep.subr.bf16.mxu0 0
        %976 = vmatpush2.bf16.msra.mxu0 0
        %977 = vmatprep.subr.bf16.mxu0 0
        %978 = vmatpush2.bf16.msra.mxu0 0
        %979 = vmatprep.subr.bf16.mxu0 0
        %980 = vmatpush2.bf16.msra.mxu0 0
        %981 = vmatprep.subr.bf16.mxu0 0
        %982 = vmatpush2.bf16.msra.mxu0 0
        %983 = vmatprep.subr.bf16.mxu0 0
        %984 = vmatpush2.bf16.msra.mxu0 0
        %985 = vmatprep.mubr.bf16.mxu0 0
        %986 = vmatmul.mubr.bf16.gmra.mxu0 %v948
        %v987 = vpop.f32.mrf.mxu0
        %v988 = vadd.f32 0.0, %v987
        %v989 = vpop.f32.mrf.mxu0
        %v990 = vpop.f32.mrf.mxu0
        %v991 = vadd.f32 0.0, %v990
        %v992 = vpop.f32.mrf.mxu0
        %993 = vdwg.mxu0
        %v994 = vrcp.pop %v940
        %v995 = vrcp.pop %v943
        %v996 = vmul.f32 %v988, %v994
        %v997 = vmul.f32 %v991, %v995
        %v998 = vpack.c.bf16 %v997, %v996
        %v1000 = vunpack.c.l.b16 %v998
        %v1001 = vunpack.c.h.b16 %v998
        %v1002 = vpack.c.b16 %v1000, %v1000
        %v1003 = vpack.c.b16 %v1001, %v1001
        %1004 = vrot.lane.b32.xlu0 %v1002, 24
        %v1005 = vpop.permute.xlu0 %1004
        %1006 = vrot.lane.b32.xlu0 %v1003, 24
        %v1007 = vpop.permute.xlu0 %1006
        %vm1010 = vcmask 257216
        %1011 = vst.msk [vmem:[#allocation2] sm:$0xf] %vm1010, %v1005
        %1012 = vst.msk [vmem:[#allocation2 + $0x4] sm:$0xf] %vm1010, %v1007
        %v1013 = vld [vmem:[#allocation2] sm:$0xf]
        %v1014 = vld [vmem:[#allocation2 + $0x4] sm:$0xf]
        %v1015 = vld [vmem:[#allocation11] sm:$0xf]
        %v1016 = vld [vmem:[#allocation11 + $0x4] sm:$0xf]
        %v1017 = vld [vmem:[#allocation11 + $0x8] sm:$0xf]
        %v1018 = vld [vmem:[#allocation11 + $0xc] sm:$0xf]
        %v1019 = vld [vmem:[%s5] sm:$0x1]
        %v1021 = vlaneseq
        %v1022 = vshrl.u32 %v1021, 7
        %v1023 = vsub.s32 0, %v1022
        %v1024 = vrot.slane %v1019, %v1023
        %v1028 = vunpack.c.l.b16 %v1013
        %v1029 = vunpack.c.l.b16 %v1014
        %v1030 = vpack.c.b16 %v1029, %v1028
        %v1035 = vunpack.c.l.b16 %v1015
        %v1036 = vunpack.c.l.b16 %v1016
        %v1037 = vunpack.c.l.b16 %v1017
        %v1038 = vunpack.c.l.b16 %v1018
        %v1039 = vpack.c.b16 %v1036, %v1035
        %v1040 = vpack.c.b16 %v1038, %v1037
        %v1044 = vsel %vm416, %v1030, 0
        %1046 = vmatprep.subr.bf16.mxu0 0
        %1047 = vmatpush1.bf16.msra.mxu0 0
        %1048 = vmatprep.subr.bf16.mxu0 0
        %1049 = vmatpush1.bf16.msra.mxu0 0
        %1050 = vmatprep.subr.bf16.mxu0 0
        %1051 = vmatpush1.bf16.msra.mxu0 0
        %1052 = vmatprep.subr.bf16.mxu0 0
        %1053 = vmatpush1.bf16.msra.mxu0 0
        %1054 = vmatprep.subr.bf16.mxu0 0
        %1055 = vmatpush1.bf16.msra.mxu0 0
        %1056 = vmatprep.subr.bf16.mxu0 0
        %1057 = vmatpush1.bf16.msra.mxu0 0
        %1058 = vmatprep.subr.bf16.mxu0 0
        %1059 = vmatpush1.bf16.msra.mxu0 %v1040
        %1060 = vmatprep.subr.bf16.mxu0 0
        %1061 = vmatpush1.bf16.msra.mxu0 %v1039
        %1062 = vmatprep.subr.bf16.mxu0 0
        %1063 = vmatpush2.bf16.msra.mxu0 0
        %1064 = vmatprep.subr.bf16.mxu0 0
        %1065 = vmatpush2.bf16.msra.mxu0 0
        %1066 = vmatprep.subr.bf16.mxu0 0
        %1067 = vmatpush2.bf16.msra.mxu0 0
        %1068 = vmatprep.subr.bf16.mxu0 0
        %1069 = vmatpush2.bf16.msra.mxu0 0
        %1070 = vmatprep.subr.bf16.mxu0 0
        %1071 = vmatpush2.bf16.msra.mxu0 0
        %1072 = vmatprep.subr.bf16.mxu0 0
        %1073 = vmatpush2.bf16.msra.mxu0 0
        %1074 = vmatprep.subr.bf16.mxu0 0
        %1075 = vmatpush2.bf16.msra.mxu0 0
        %1076 = vmatprep.subr.bf16.mxu0 0
        %1077 = vmatpush2.bf16.msra.mxu0 0
        %1078 = vmatprep.mubr.bf16.mxu0 0
        %1079 = vmatmul.mubr.bf16.gmra.mxu0 %v1044
        %v1080 = vpop.f32.mrf.mxu0
        %v1081 = vadd.f32 %v1024, %v1080
        %v1082 = vpop.f32.mrf.mxu0
        %v1083 = vpop.f32.mrf.mxu0
        %v1084 = vadd.f32 %v1024, %v1083
        %v1085 = vpop.f32.mrf.mxu0
        %1086 = vdwg.mxu0
        %1087 = vst.msk [vmem:[%s387] sm:$0xff] %vm416, %v1081
        %1088 = vst.msk [vmem:[%s387 + $0x8] sm:$0xff] %vm416, %v1084
        %s1089 = sand.u32 %s192, 1
        %s1090 = scalar_lea.sflag [#allocation5], %s1089
        %s1091 = sand.u32 %s192, 1
        %s1092 = smul.addr %s1091, 16
        %s1093 = scalar_lea.vmem [#allocation12], %s1092
        // Predicated region
        $region65: #{tpu_custom_call.1} parent=43 // pred_check
          %p1094 = pneg %p202
        $region66: #{tpu_custom_call.1} parent=43 // pred_check_branch
          %1096 = sbr.rel (%p1094) target = $region68
        $region67: #{tpu_custom_call.1} parent=43 // pred_region
          %s1097 = smul.u32 2, %s32
          %s1099 = ssub.s32 256, 256
          %1100 = vsyncadd %s1090, %s1099
          %s1101 = smul.addr %s31, 2
          %s1102 = sadd.s32 %s1097, %s1101
          %s1103 = smul.addr %s1102, 128
          %s1104 = scalar_lea.hbm %s6, %s1103
          %s1105 = sshll.u32 %s1093, 4
          %s1106 = int_to_ptr.vmem [resolvable:$true] %s1105
          %1111 = dma.vmem_to_hbm [thread:$0]  %s1106, 256, %s1104, %s1090, 128, 128, 8
        $region68: #{tpu_custom_call.1} parent=43 // pred_fallthru
          _
      $region44: #{tpu_custom_call.1} parent=5 // pred_fallthru
        _
      %p1112 = scmp.le.s32.totalorder 2, %s22
      // Predicated region
      $region69: #{tpu_custom_call.1} parent=5 // pred_check
        %p1113 = pneg %p1112
      $region70: #{tpu_custom_call.1} parent=5 // pred_check_branch
        %1115 = sbr.rel (%p1113) target = $region72
      $region71: #{tpu_custom_call.1} parent=5 // pred_region
        %s1116 = ssub.s32 %s22, 2
        // Predicated region
        $region73: #{tpu_custom_call.1} parent=71 // pred_check
          %p1117 = pneg %p208
        $region74: #{tpu_custom_call.1} parent=71 // pred_check_branch
          %1119 = sbr.rel (%p1117) target = $region76
        $region75: #{tpu_custom_call.1} parent=71 // pred_region
          %s1120 = sand.u32 %s193, 1
          %s1121 = scalar_lea.sflag [#allocation5], %s1120
          %s1122 = sand.u32 %s193, 1
          %s1123 = smul.addr %s1122, 16
          %s1124 = scalar_lea.vmem [#allocation12], %s1123
          %1125 = dma.done %s1121, 256
        $region76: #{tpu_custom_call.1} parent=71 // pred_fallthru
          _
      $region72: #{tpu_custom_call.1} parent=5 // pred_fallthru
        _
    $region6: #{tpu_custom_call.1} parent=1 // loop_footer
      %s26 = sadd.s32 1, %s22
    $region7: #{tpu_custom_call.1} parent=1 // loop_footer_branch
      %21 = sbr.rel target = $region3
    $region8: #{tpu_custom_call.1} parent=1 // loop_exit
      _
    %1126 = vsyncpa [#allocation4], 1
    %s1127 = scalar_lea.sflag [#allocation4], 1
    %1128 = vsyncpa %s1127, 1
    %1129 = vsyncpa [#allocation7], 1
    %s1130 = scalar_lea.sflag [#allocation7], 1
    %1131 = vsyncpa %s1130, 1
    %1132 = vsyncpa [#allocation10], 1
    %1133 = vsyncpa [#allocation5], 1
    %s1134 = scalar_lea.sflag [#allocation5], 1
    %1135 = vsyncpa %s1134, 1

</llo_original>
